<compile_context>
chip_gen: v5e
topology: v5e:2x2
jax: 0.10.0
libtpu: 0.0.40
codegen_flags: <defaults>
</compile_context>

<pallas_src>
import numpy as np

import jax
import jax.numpy as jnp
from jax.experimental import pallas as pl
from jax.experimental.pallas import tpu as pltpu

_WPAD = 32   # image width 28 padded to a sublane-friendly contraction dim


# ----------------------------- fused kernel -----------------------------

def _net_kernel(x_ref, t1_ref, b1_ref, t2_ref, b2_ref,
                w1p_ref, bfc1_ref, wfc2_ref, bfc2_ref, o_ref):
    """Whole-net forward for one batch tile (BT examples).

    x_ref   : (1, 4, 7*BT, 32) bf16  mod-4 space-to-depth input; slab R holds
                                     rows h = 4*m + R, row index = m*BT + n.
    t1_ref  : (5, 32, 240) bf16      conv1 width-Toeplitz, cols = (s, q, c10).
    b1_ref  : (1, 120) f32           conv1 bias tiled over pooled-w.
    t2_ref  : (5, 120, 160) bf16     conv2 width-Toeplitz, rows = (w, c10),
                                     cols = (s2, q2, c20).
    b2_ref  : (1, 80) f32            conv2 bias tiled over pooled-w.
    w1p_ref : (4, 80, 50) bf16       fc1 weight split per pooled-h row.
    bfc1_ref: (1, 50) f32
    wfc2_ref: (50, 10) bf16
    bfc2_ref: (1, 10) f32
    o_ref   : (1, BT, 10) f32        log-probs.
    """
    bt = o_ref.shape[1]

    # ---- conv1 (5x5) + 2x2 maxpool + bias + ReLU -------------------------
    # Result kept in pooled-h parity-split form so conv2's stride-2 row access
    # becomes contiguous slices:
    #   a1[rho]: (6*BT, 120) bf16, rows = (m, n) with pooled h = 2*m + rho,
    #   lanes = (pooled w q in [0,12), cout in [0,10)).
    a1 = []
    for rho in range(2):                      # parity of pooled-h index
        acc = None
        for rp in range(2):                   # pre-pool conv row parity
            y = None
            for i in range(5):                # kernel row offset
                d = 2 * rho + rp + i          # input h = 4*m + d, d in [0,8)
                r4, base = d % 4, d // 4
                lhs = x_ref[0, r4, base * bt:(base + 6) * bt, :]
                t = jnp.dot(lhs, t1_ref[i],
                            preferred_element_type=jnp.float32)
                y = t if y is None else y + t
            acc = y if acc is None else jnp.maximum(acc, y)     # pool over h
        pooled = jnp.maximum(acc[:, :120], acc[:, 120:])        # pool over w
        a1.append(jnp.maximum(pooled + b1_ref[...], 0.0)
                  .astype(jnp.bfloat16))

    # ---- conv2 (5x5) + 2x2 maxpool + bias + ReLU -------------------------
    #   a2: (4*BT, 80) bf16, rows = (u2 in [0,4), n),
    #   lanes = (pooled w q2 in [0,4), cout in [0,20)).
    acc2 = None
    for rp in range(2):                       # pre-pool conv2 row parity
        y = None
        for i in range(5):
            d = rp + i                        # a1 row h1 = 2*u2 + d
            rho, base = d % 2, d // 2
            lhs = a1[rho][base * bt:(base + 4) * bt, :]
            t = jnp.dot(lhs, t2_ref[i], preferred_element_type=jnp.float32)
            y = t if y is None else y + t
        acc2 = y if acc2 is None else jnp.maximum(acc2, y)      # pool over h
    pooled2 = jnp.maximum(acc2[:, :80], acc2[:, 80:])           # pool over w
    a2 = jnp.maximum(pooled2 + b2_ref[...], 0.0).astype(jnp.bfloat16)

    # ---- fc1 + ReLU + fc2 + log_softmax ----------------------------------
    h = None
    for u2 in range(4):                       # contract over the 4 pooled rows
        t = jnp.dot(a2[u2 * bt:(u2 + 1) * bt, :], w1p_ref[u2],
                    preferred_element_type=jnp.float32)
        h = t if h is None else h + t
    h = jnp.maximum(h + bfc1_ref[...], 0.0).astype(jnp.bfloat16)
    z = jnp.dot(h, wfc2_ref[...],
                preferred_element_type=jnp.float32) + bfc2_ref[...]
    z = z - jnp.max(z, axis=-1, keepdims=True)
    o_ref[0, :, :] = z - jnp.log(jnp.sum(jnp.exp(z), axis=-1, keepdims=True))


# ----------------------------- JAX wrapper -----------------------------

def net_forward(x_nchw, p, block_batch=None):
    """Full Net forward (eval mode) as a single fused pallas_call."""
    n = x_nchw.shape[0]
    x = x_nchw.reshape(n, 28, 28).astype(jnp.bfloat16)

    # Batch tile size: keep >= 2 grid programs whenever n >= 2 (v7x megacore).
    bt = block_batch or max(1, min(8, (n + 1) // 2))
    g = -(-n // bt)
    n_pad = g * bt

    x = jnp.pad(x, ((0, n_pad - n), (0, 0), (0, _WPAD - 28)))
    # mod-4 space-to-depth over H, batch interleaved inside each tile:
    #   x4[gi, R, m*bt + t, w] = x[gi*bt + t, 4*m + R, w]
    x4 = (x.reshape(g, bt, 7, 4, _WPAD)
            .transpose(0, 3, 2, 1, 4)
            .reshape(g, 4, 7 * bt, _WPAD))

    out = pl.pallas_call(
        _net_kernel,
        out_shape=jax.ShapeDtypeStruct((g, bt, 10), jnp.float32),
        grid=(g,),
        in_specs=[
            pl.BlockSpec((1, 4, 7 * bt, _WPAD), lambda i: (i, 0, 0, 0)),
            pl.BlockSpec((5, _WPAD, 240), lambda i: (0, 0, 0)),
            pl.BlockSpec((1, 120), lambda i: (0, 0)),
            pl.BlockSpec((5, 120, 160), lambda i: (0, 0, 0)),
            pl.BlockSpec((1, 80), lambda i: (0, 0)),
            pl.BlockSpec((4, 80, 50), lambda i: (0, 0, 0)),
            pl.BlockSpec((1, 50), lambda i: (0, 0)),
            pl.BlockSpec((50, 10), lambda i: (0, 0)),
            pl.BlockSpec((1, 10), lambda i: (0, 0)),
        ],
        out_specs=pl.BlockSpec((1, bt, 10), lambda i: (i, 0, 0)),
        compiler_params=pltpu.CompilerParams(
            dimension_semantics=("parallel",)),
    )(x4, p["t1"], p["b1"], p["t2"], p["b2"],
      p["w1p"], p["bfc1"], p["wfc2"], p["bfc2"])

    return out.reshape(n_pad, 10)[:n]


# ----------------------------- weight prep -----------------------------

def prepare_params(p):
    """One-time layout prep (runs on host with numpy):
       - conv weights expanded into width-Toeplitz matrices whose output
         columns are ordered (w-parity, pooled-w, cout) so maxpool over w is a
         contiguous lane-half max,
       - biases tiled to the pooled-w lane layout,
       - fc1 weight permuted so PyTorch's (C,H,W) flatten matches our
         (pooled-h row, (pooled-w, c) lane) activation layout,
       - all matmul operands cast to bf16.
    """
    w1 = np.asarray(jax.device_get(p["w1"]), np.float32)     # (10, 1, 5, 5)
    b1 = np.asarray(jax.device_get(p["b1"]), np.float32)
    w2 = np.asarray(jax.device_get(p["w2"]), np.float32)     # (20, 10, 5, 5)
    b2 = np.asarray(jax.device_get(p["b2"]), np.float32)
    wfc1 = np.asarray(jax.device_get(p["wfc1"]), np.float32)  # (50, 320)
    bfc1 = np.asarray(jax.device_get(p["bfc1"]), np.float32)
    wfc2 = np.asarray(jax.device_get(p["wfc2"]), np.float32)  # (10, 50)
    bfc2 = np.asarray(jax.device_get(p["bfc2"]), np.float32)

    # conv1 Toeplitz over width: rows = w_in (padded to 32),
    # cols = (s in {0,1}, q in [0,12), cout in [0,10)), w_out = 2*q + s.
    t1 = np.zeros((5, _WPAD, 2, 12, 10), np.float32)
    for i in range(5):
        for j in range(5):
            for s in range(2):
                for q in range(12):
                    t1[i, 2 * q + s + j, s, q, :] = w1[:, 0, i, j]
    t1 = t1.reshape(5, _WPAD, 240)

    # conv2 Toeplitz: rows = (w in [0,12), cin in [0,10)),
    # cols = (s2 in {0,1}, q2 in [0,4), cout in [0,20)), w_out = 2*q2 + s2.
    t2 = np.zeros((5, 12, 10, 2, 4, 20), np.float32)
    for i in range(5):
        for j in range(5):
            for s in range(2):
                for q in range(4):
                    t2[i, 2 * q + s + j, :, s, q, :] = w2[:, :, i, j].T
    t2 = t2.reshape(5, 120, 160)

    # fc1: PyTorch flatten index = c*16 + h*4 + w ; our a2 layout is
    # row = pooled-h (u2), lane = w*20 + c  ->  (4, 80, 50) per-row blocks.
    w1p = np.transpose(wfc1.reshape(50, 20, 4, 4), (2, 3, 1, 0)).reshape(4, 80, 50)

    return {
        "t1": jnp.asarray(t1, jnp.bfloat16),
        "b1": jnp.asarray(np.tile(b1, 12).reshape(1, 120), jnp.float32),
        "t2": jnp.asarray(t2, jnp.bfloat16),
        "b2": jnp.asarray(np.tile(b2, 4).reshape(1, 80), jnp.float32),
        "w1p": jnp.asarray(w1p, jnp.bfloat16),
        "bfc1": jnp.asarray(bfc1.reshape(1, 50), jnp.float32),
        "wfc2": jnp.asarray(wfc2.T, jnp.bfloat16),
        "bfc2": jnp.asarray(bfc2.reshape(1, 10), jnp.float32),
    }


# ----------------------------- reference & init -----------------------------

def net_reference(x_nchw, p):
    """Pure-JAX (XLA) f32 reference of the PyTorch forward (eval mode)."""
    def conv(x, w, b):
        y = jax.lax.conv_general_dilated(
            x, w, (1, 1), "VALID", dimension_numbers=("NCHW", "OIHW", "NCHW"))
        return y + b.reshape(1, -1, 1, 1)

    def pool_relu(x):
        x = jax.lax.reduce_window(x, -jnp.inf, jax.lax.max,
                                  (1, 1, 2, 2), (1, 1, 2, 2), "VALID")
        return jnp.maximum(x, 0.0)

    x = x_nchw.astype(jnp.float32)
    x = pool_relu(conv(x, p["w1"], p["b1"]))
    x = pool_relu(conv(x, p["w2"], p["b2"]))
    x = x.reshape(x.shape[0], -1)                     # (N, 320), (C,H,W) order
    x = jnp.maximum(x @ p["wfc1"].T + p["bfc1"], 0.0)
    x = x @ p["wfc2"].T + p["bfc2"]
    return jax.nn.log_softmax(x, axis=-1)


def init_params(key):
    """PyTorch-style uniform(-1/sqrt(fan_in), 1/sqrt(fan_in))."""
    ks = jax.random.split(key, 8)

    def u(k, shape, fan_in):
        bound = 1.0 / (fan_in ** 0.5)
        return jax.random.uniform(k, shape, jnp.float32, -bound, bound)

    return {
        "w1": u(ks[0], (10, 1, 5, 5), 1 * 5 * 5),
        "b1": u(ks[1], (10,), 1 * 5 * 5),
        "w2": u(ks[2], (20, 10, 5, 5), 10 * 5 * 5),
        "b2": u(ks[3], (20,), 10 * 5 * 5),
        "wfc1": u(ks[4], (50, 320), 320),
        "bfc1": u(ks[5], (50,), 320),
        "wfc2": u(ks[6], (10, 50), 50),
        "bfc2": u(ks[7], (10,), 50),
    }


if __name__ == "__main__":
    key = jax.random.PRNGKey(0)
    k_x, k_p = jax.random.split(key)
    # MNIST-shaped input (28x28 is required so the flatten gives 20*4*4 = 320).
    x = jax.random.normal(k_x, (2, 1, 28, 28), dtype=jnp.float32)
    params = init_params(k_p)
    prepped = prepare_params(params)

    out = jax.jit(net_forward)(x, prepped)
    out = jax.block_until_ready(out)

    assert out.shape == (2, 10)
    # log_softmax rows exponentiate-sum to 1.
    assert bool(jnp.all(jnp.abs(jnp.sum(jnp.exp(out), axis=-1) - 1.0) < 1e-3))
    # Matches the pure-JAX f32 reference (loose tol: bf16 MXU operands).
    ref = jax.jit(net_reference)(x, params)
    assert float(jnp.max(jnp.abs(out - ref))) < 1e-1
    print("KERNEL_OK")
</pallas_src>

<mosaic_0001>
module attributes {stable_mosaic.version = 11 : i64} {
  func.func @_net_kernel(%arg0: i32, %arg1: memref<1x4x7x32xbf16, #tpu.memory_space<vmem>>, %arg2: memref<5x32x240xbf16, #tpu.memory_space<vmem>>, %arg3: memref<1x120xf32, #tpu.memory_space<vmem>>, %arg4: memref<5x120x160xbf16, #tpu.memory_space<vmem>>, %arg5: memref<1x80xf32, #tpu.memory_space<vmem>>, %arg6: memref<4x80x50xbf16, #tpu.memory_space<vmem>>, %arg7: memref<1x50xf32, #tpu.memory_space<vmem>>, %arg8: memref<50x10xbf16, #tpu.memory_space<vmem>>, %arg9: memref<1x10xf32, #tpu.memory_space<vmem>>, %arg10: memref<1x1x10xf32, #tpu.memory_space<vmem>>) attributes {dimension_semantics = [#tpu.dimension_semantics<parallel>], iteration_bounds = array<i64: 2>, scalar_prefetch = 0 : i64, scratch_operands = 0 : i64, tpu.core_type = #tpu.core_type<tc>, window_params = [{transform_indices = @transform_0, window_bounds = array<i64: 1, 4, 7, 32>}, {pipeline_mode = #tpu.pipeline_mode<synchronous>, transform_indices = @transform_1, window_bounds = array<i64: 5, 32, 240>}, {pipeline_mode = #tpu.pipeline_mode<synchronous>, transform_indices = @transform_2, window_bounds = array<i64: 1, 120>}, {pipeline_mode = #tpu.pipeline_mode<synchronous>, transform_indices = @transform_3, window_bounds = array<i64: 5, 120, 160>}, {pipeline_mode = #tpu.pipeline_mode<synchronous>, transform_indices = @transform_4, window_bounds = array<i64: 1, 80>}, {pipeline_mode = #tpu.pipeline_mode<synchronous>, transform_indices = @transform_5, window_bounds = array<i64: 4, 80, 50>}, {pipeline_mode = #tpu.pipeline_mode<synchronous>, transform_indices = @transform_6, window_bounds = array<i64: 1, 50>}, {pipeline_mode = #tpu.pipeline_mode<synchronous>, transform_indices = @transform_7, window_bounds = array<i64: 50, 10>}, {pipeline_mode = #tpu.pipeline_mode<synchronous>, transform_indices = @transform_8, window_bounds = array<i64: 1, 10>}, {transform_indices = @transform_9, window_bounds = array<i64: 1, 1, 10>}]} {
    %c0 = arith.constant 0 : index
    %c0_0 = arith.constant 0 : index
    %c0_1 = arith.constant 0 : index
    %c0_2 = arith.constant 0 : index
    %0 = vector.load %arg1[%c0, %c0_0, %c0_1, %c0_2] : memref<1x4x7x32xbf16, #tpu.memory_space<vmem>>, vector<1x1x6x32xbf16>
    %1 = vector.shape_cast %0 : vector<1x1x6x32xbf16> to vector<6x32xbf16>
    %c0_3 = arith.constant 0 : index
    %c0_4 = arith.constant 0 : index
    %c0_5 = arith.constant 0 : index
    %2 = vector.load %arg2[%c0_3, %c0_4, %c0_5] : memref<5x32x240xbf16, #tpu.memory_space<vmem>>, vector<1x32x240xbf16>
    %3 = vector.shape_cast %2 : vector<1x32x240xbf16> to vector<32x240xbf16>
    %cst = arith.constant dense<0.000000e+00> : vector<6x240xf32>
    %4 = tpu.matmul %1, %3, %cst {dimension_numbers = #tpu.dot_dimension_numbers<[1], [0], [0], [1], [0, 0, 1, 1], [], []>} : vector<6x32xbf16>, vector<32x240xbf16>, vector<6x240xf32> -> vector<6x240xf32>
    %c0_6 = arith.constant 0 : index
    %c1 = arith.constant 1 : index
    %c0_7 = arith.constant 0 : index
    %c0_8 = arith.constant 0 : index
    %5 = vector.load %arg1[%c0_6, %c1, %c0_7, %c0_8] : memref<1x4x7x32xbf16, #tpu.memory_space<vmem>>, vector<1x1x6x32xbf16>
    %6 = vector.shape_cast %5 : vector<1x1x6x32xbf16> to vector<6x32xbf16>
    %c1_9 = arith.constant 1 : index
    %c0_10 = arith.constant 0 : index
    %c0_11 = arith.constant 0 : index
    %7 = vector.load %arg2[%c1_9, %c0_10, %c0_11] : memref<5x32x240xbf16, #tpu.memory_space<vmem>>, vector<1x32x240xbf16>
    %8 = vector.shape_cast %7 : vector<1x32x240xbf16> to vector<32x240xbf16>
    %cst_12 = arith.constant dense<0.000000e+00> : vector<6x240xf32>
    %9 = tpu.matmul %6, %8, %cst_12 {dimension_numbers = #tpu.dot_dimension_numbers<[1], [0], [0], [1], [0, 0, 1, 1], [], []>} : vector<6x32xbf16>, vector<32x240xbf16>, vector<6x240xf32> -> vector<6x240xf32>
    %10 = arith.addf %4, %9 : vector<6x240xf32>
    %c0_13 = arith.constant 0 : index
    %c2 = arith.constant 2 : index
    %c0_14 = arith.constant 0 : index
    %c0_15 = arith.constant 0 : index
    %11 = vector.load %arg1[%c0_13, %c2, %c0_14, %c0_15] : memref<1x4x7x32xbf16, #tpu.memory_space<vmem>>, vector<1x1x6x32xbf16>
    %12 = vector.shape_cast %11 : vector<1x1x6x32xbf16> to vector<6x32xbf16>
    %c2_16 = arith.constant 2 : index
    %c0_17 = arith.constant 0 : index
    %c0_18 = arith.constant 0 : index
    %13 = vector.load %arg2[%c2_16, %c0_17, %c0_18] : memref<5x32x240xbf16, #tpu.memory_space<vmem>>, vector<1x32x240xbf16>
    %14 = vector.shape_cast %13 : vector<1x32x240xbf16> to vector<32x240xbf16>
    %cst_19 = arith.constant dense<0.000000e+00> : vector<6x240xf32>
    %15 = tpu.matmul %12, %14, %cst_19 {dimension_numbers = #tpu.dot_dimension_numbers<[1], [0], [0], [1], [0, 0, 1, 1], [], []>} : vector<6x32xbf16>, vector<32x240xbf16>, vector<6x240xf32> -> vector<6x240xf32>
    %16 = arith.addf %10, %15 : vector<6x240xf32>
    %c0_20 = arith.constant 0 : index
    %c3 = arith.constant 3 : index
    %c0_21 = arith.constant 0 : index
    %c0_22 = arith.constant 0 : index
    %17 = vector.load %arg1[%c0_20, %c3, %c0_21, %c0_22] : memref<1x4x7x32xbf16, #tpu.memory_space<vmem>>, vector<1x1x6x32xbf16>
    %18 = vector.shape_cast %17 : vector<1x1x6x32xbf16> to vector<6x32xbf16>
    %c3_23 = arith.constant 3 : index
    %c0_24 = arith.constant 0 : index
    %c0_25 = arith.constant 0 : index
    %19 = vector.load %arg2[%c3_23, %c0_24, %c0_25] : memref<5x32x240xbf16, #tpu.memory_space<vmem>>, vector<1x32x240xbf16>
    %20 = vector.shape_cast %19 : vector<1x32x240xbf16> to vector<32x240xbf16>
    %cst_26 = arith.constant dense<0.000000e+00> : vector<6x240xf32>
    %21 = tpu.matmul %18, %20, %cst_26 {dimension_numbers = #tpu.dot_dimension_numbers<[1], [0], [0], [1], [0, 0, 1, 1], [], []>} : vector<6x32xbf16>, vector<32x240xbf16>, vector<6x240xf32> -> vector<6x240xf32>
    %22 = arith.addf %16, %21 : vector<6x240xf32>
    %c0_27 = arith.constant 0 : index
    %c0_28 = arith.constant 0 : index
    %c1_29 = arith.constant 1 : index
    %c0_30 = arith.constant 0 : index
    %23 = vector.load %arg1[%c0_27, %c0_28, %c1_29, %c0_30] : memref<1x4x7x32xbf16, #tpu.memory_space<vmem>>, vector<1x1x6x32xbf16>
    %24 = vector.shape_cast %23 : vector<1x1x6x32xbf16> to vector<6x32xbf16>
    %c4 = arith.constant 4 : index
    %c0_31 = arith.constant 0 : index
    %c0_32 = arith.constant 0 : index
    %25 = vector.load %arg2[%c4, %c0_31, %c0_32] : memref<5x32x240xbf16, #tpu.memory_space<vmem>>, vector<1x32x240xbf16>
    %26 = vector.shape_cast %25 : vector<1x32x240xbf16> to vector<32x240xbf16>
    %cst_33 = arith.constant dense<0.000000e+00> : vector<6x240xf32>
    %27 = tpu.matmul %24, %26, %cst_33 {dimension_numbers = #tpu.dot_dimension_numbers<[1], [0], [0], [1], [0, 0, 1, 1], [], []>} : vector<6x32xbf16>, vector<32x240xbf16>, vector<6x240xf32> -> vector<6x240xf32>
    %28 = arith.addf %22, %27 : vector<6x240xf32>
    %c0_34 = arith.constant 0 : index
    %c1_35 = arith.constant 1 : index
    %c0_36 = arith.constant 0 : index
    %c0_37 = arith.constant 0 : index
    %29 = vector.load %arg1[%c0_34, %c1_35, %c0_36, %c0_37] : memref<1x4x7x32xbf16, #tpu.memory_space<vmem>>, vector<1x1x6x32xbf16>
    %30 = vector.shape_cast %29 : vector<1x1x6x32xbf16> to vector<6x32xbf16>
    %c0_38 = arith.constant 0 : index
    %c0_39 = arith.constant 0 : index
    %c0_40 = arith.constant 0 : index
    %31 = vector.load %arg2[%c0_38, %c0_39, %c0_40] : memref<5x32x240xbf16, #tpu.memory_space<vmem>>, vector<1x32x240xbf16>
    %32 = vector.shape_cast %31 : vector<1x32x240xbf16> to vector<32x240xbf16>
    %cst_41 = arith.constant dense<0.000000e+00> : vector<6x240xf32>
    %33 = tpu.matmul %30, %32, %cst_41 {dimension_numbers = #tpu.dot_dimension_numbers<[1], [0], [0], [1], [0, 0, 1, 1], [], []>} : vector<6x32xbf16>, vector<32x240xbf16>, vector<6x240xf32> -> vector<6x240xf32>
    %c0_42 = arith.constant 0 : index
    %c2_43 = arith.constant 2 : index
    %c0_44 = arith.constant 0 : index
    %c0_45 = arith.constant 0 : index
    %34 = vector.load %arg1[%c0_42, %c2_43, %c0_44, %c0_45] : memref<1x4x7x32xbf16, #tpu.memory_space<vmem>>, vector<1x1x6x32xbf16>
    %35 = vector.shape_cast %34 : vector<1x1x6x32xbf16> to vector<6x32xbf16>
    %c1_46 = arith.constant 1 : index
    %c0_47 = arith.constant 0 : index
    %c0_48 = arith.constant 0 : index
    %36 = vector.load %arg2[%c1_46, %c0_47, %c0_48] : memref<5x32x240xbf16, #tpu.memory_space<vmem>>, vector<1x32x240xbf16>
    %37 = vector.shape_cast %36 : vector<1x32x240xbf16> to vector<32x240xbf16>
    %cst_49 = arith.constant dense<0.000000e+00> : vector<6x240xf32>
    %38 = tpu.matmul %35, %37, %cst_49 {dimension_numbers = #tpu.dot_dimension_numbers<[1], [0], [0], [1], [0, 0, 1, 1], [], []>} : vector<6x32xbf16>, vector<32x240xbf16>, vector<6x240xf32> -> vector<6x240xf32>
    %39 = arith.addf %33, %38 : vector<6x240xf32>
    %c0_50 = arith.constant 0 : index
    %c3_51 = arith.constant 3 : index
    %c0_52 = arith.constant 0 : index
    %c0_53 = arith.constant 0 : index
    %40 = vector.load %arg1[%c0_50, %c3_51, %c0_52, %c0_53] : memref<1x4x7x32xbf16, #tpu.memory_space<vmem>>, vector<1x1x6x32xbf16>
    %41 = vector.shape_cast %40 : vector<1x1x6x32xbf16> to vector<6x32xbf16>
    %c2_54 = arith.constant 2 : index
    %c0_55 = arith.constant 0 : index
    %c0_56 = arith.constant 0 : index
    %42 = vector.load %arg2[%c2_54, %c0_55, %c0_56] : memref<5x32x240xbf16, #tpu.memory_space<vmem>>, vector<1x32x240xbf16>
    %43 = vector.shape_cast %42 : vector<1x32x240xbf16> to vector<32x240xbf16>
    %cst_57 = arith.constant dense<0.000000e+00> : vector<6x240xf32>
    %44 = tpu.matmul %41, %43, %cst_57 {dimension_numbers = #tpu.dot_dimension_numbers<[1], [0], [0], [1], [0, 0, 1, 1], [], []>} : vector<6x32xbf16>, vector<32x240xbf16>, vector<6x240xf32> -> vector<6x240xf32>
    %45 = arith.addf %39, %44 : vector<6x240xf32>
    %c0_58 = arith.constant 0 : index
    %c0_59 = arith.constant 0 : index
    %c1_60 = arith.constant 1 : index
    %c0_61 = arith.constant 0 : index
    %46 = vector.load %arg1[%c0_58, %c0_59, %c1_60, %c0_61] : memref<1x4x7x32xbf16, #tpu.memory_space<vmem>>, vector<1x1x6x32xbf16>
    %47 = vector.shape_cast %46 : vector<1x1x6x32xbf16> to vector<6x32xbf16>
    %c3_62 = arith.constant 3 : index
    %c0_63 = arith.constant 0 : index
    %c0_64 = arith.constant 0 : index
    %48 = vector.load %arg2[%c3_62, %c0_63, %c0_64] : memref<5x32x240xbf16, #tpu.memory_space<vmem>>, vector<1x32x240xbf16>
    %49 = vector.shape_cast %48 : vector<1x32x240xbf16> to vector<32x240xbf16>
    %cst_65 = arith.constant dense<0.000000e+00> : vector<6x240xf32>
    %50 = tpu.matmul %47, %49, %cst_65 {dimension_numbers = #tpu.dot_dimension_numbers<[1], [0], [0], [1], [0, 0, 1, 1], [], []>} : vector<6x32xbf16>, vector<32x240xbf16>, vector<6x240xf32> -> vector<6x240xf32>
    %51 = arith.addf %45, %50 : vector<6x240xf32>
    %c0_66 = arith.constant 0 : index
    %c1_67 = arith.constant 1 : index
    %c1_68 = arith.constant 1 : index
    %c0_69 = arith.constant 0 : index
    %52 = vector.load %arg1[%c0_66, %c1_67, %c1_68, %c0_69] : memref<1x4x7x32xbf16, #tpu.memory_space<vmem>>, vector<1x1x6x32xbf16>
    %53 = vector.shape_cast %52 : vector<1x1x6x32xbf16> to vector<6x32xbf16>
    %c4_70 = arith.constant 4 : index
    %c0_71 = arith.constant 0 : index
    %c0_72 = arith.constant 0 : index
    %54 = vector.load %arg2[%c4_70, %c0_71, %c0_72] : memref<5x32x240xbf16, #tpu.memory_space<vmem>>, vector<1x32x240xbf16>
    %55 = vector.shape_cast %54 : vector<1x32x240xbf16> to vector<32x240xbf16>
    %cst_73 = arith.constant dense<0.000000e+00> : vector<6x240xf32>
    %56 = tpu.matmul %53, %55, %cst_73 {dimension_numbers = #tpu.dot_dimension_numbers<[1], [0], [0], [1], [0, 0, 1, 1], [], []>} : vector<6x32xbf16>, vector<32x240xbf16>, vector<6x240xf32> -> vector<6x240xf32>
    %57 = arith.addf %51, %56 : vector<6x240xf32>
    %58 = arith.maximumf %28, %57 : vector<6x240xf32>
    %59 = vector.extract_strided_slice %58 {offsets = [0, 0], sizes = [6, 120], strides = [1, 1]} : vector<6x240xf32> to vector<6x120xf32>
    %60 = vector.extract_strided_slice %58 {offsets = [0, 120], sizes = [6, 120], strides = [1, 1]} : vector<6x240xf32> to vector<6x120xf32>
    %61 = arith.maximumf %59, %60 : vector<6x120xf32>
    %c0_74 = arith.constant 0 : index
    %c0_75 = arith.constant 0 : index
    %62 = vector.load %arg3[%c0_74, %c0_75] : memref<1x120xf32, #tpu.memory_space<vmem>>, vector<1x120xf32>
    %63 = vector.broadcast %62 : vector<1x120xf32> to vector<6x120xf32>
    %64 = arith.addf %61, %63 : vector<6x120xf32>
    %cst_76 = arith.constant 0.000000e+00 : f32
    %65 = vector.broadcast %cst_76 : f32 to vector<6x120xf32>
    %66 = arith.maximumf %64, %65 : vector<6x120xf32>
    %67 = arith.truncf %66 : vector<6x120xf32> to vector<6x120xbf16>
    %c0_77 = arith.constant 0 : index
    %c2_78 = arith.constant 2 : index
    %c0_79 = arith.constant 0 : index
    %c0_80 = arith.constant 0 : index
    %68 = vector.load %arg1[%c0_77, %c2_78, %c0_79, %c0_80] : memref<1x4x7x32xbf16, #tpu.memory_space<vmem>>, vector<1x1x6x32xbf16>
    %69 = vector.shape_cast %68 : vector<1x1x6x32xbf16> to vector<6x32xbf16>
    %c0_81 = arith.constant 0 : index
    %c0_82 = arith.constant 0 : index
    %c0_83 = arith.constant 0 : index
    %70 = vector.load %arg2[%c0_81, %c0_82, %c0_83] : memref<5x32x240xbf16, #tpu.memory_space<vmem>>, vector<1x32x240xbf16>
    %71 = vector.shape_cast %70 : vector<1x32x240xbf16> to vector<32x240xbf16>
    %cst_84 = arith.constant dense<0.000000e+00> : vector<6x240xf32>
    %72 = tpu.matmul %69, %71, %cst_84 {dimension_numbers = #tpu.dot_dimension_numbers<[1], [0], [0], [1], [0, 0, 1, 1], [], []>} : vector<6x32xbf16>, vector<32x240xbf16>, vector<6x240xf32> -> vector<6x240xf32>
    %c0_85 = arith.constant 0 : index
    %c3_86 = arith.constant 3 : index
    %c0_87 = arith.constant 0 : index
    %c0_88 = arith.constant 0 : index
    %73 = vector.load %arg1[%c0_85, %c3_86, %c0_87, %c0_88] : memref<1x4x7x32xbf16, #tpu.memory_space<vmem>>, vector<1x1x6x32xbf16>
    %74 = vector.shape_cast %73 : vector<1x1x6x32xbf16> to vector<6x32xbf16>
    %c1_89 = arith.constant 1 : index
    %c0_90 = arith.constant 0 : index
    %c0_91 = arith.constant 0 : index
    %75 = vector.load %arg2[%c1_89, %c0_90, %c0_91] : memref<5x32x240xbf16, #tpu.memory_space<vmem>>, vector<1x32x240xbf16>
    %76 = vector.shape_cast %75 : vector<1x32x240xbf16> to vector<32x240xbf16>
    %cst_92 = arith.constant dense<0.000000e+00> : vector<6x240xf32>
    %77 = tpu.matmul %74, %76, %cst_92 {dimension_numbers = #tpu.dot_dimension_numbers<[1], [0], [0], [1], [0, 0, 1, 1], [], []>} : vector<6x32xbf16>, vector<32x240xbf16>, vector<6x240xf32> -> vector<6x240xf32>
    %78 = arith.addf %72, %77 : vector<6x240xf32>
    %c0_93 = arith.constant 0 : index
    %c0_94 = arith.constant 0 : index
    %c1_95 = arith.constant 1 : index
    %c0_96 = arith.constant 0 : index
    %79 = vector.load %arg1[%c0_93, %c0_94, %c1_95, %c0_96] : memref<1x4x7x32xbf16, #tpu.memory_space<vmem>>, vector<1x1x6x32xbf16>
    %80 = vector.shape_cast %79 : vector<1x1x6x32xbf16> to vector<6x32xbf16>
    %c2_97 = arith.constant 2 : index
    %c0_98 = arith.constant 0 : index
    %c0_99 = arith.constant 0 : index
    %81 = vector.load %arg2[%c2_97, %c0_98, %c0_99] : memref<5x32x240xbf16, #tpu.memory_space<vmem>>, vector<1x32x240xbf16>
    %82 = vector.shape_cast %81 : vector<1x32x240xbf16> to vector<32x240xbf16>
    %cst_100 = arith.constant dense<0.000000e+00> : vector<6x240xf32>
    %83 = tpu.matmul %80, %82, %cst_100 {dimension_numbers = #tpu.dot_dimension_numbers<[1], [0], [0], [1], [0, 0, 1, 1], [], []>} : vector<6x32xbf16>, vector<32x240xbf16>, vector<6x240xf32> -> vector<6x240xf32>
    %84 = arith.addf %78, %83 : vector<6x240xf32>
    %c0_101 = arith.constant 0 : index
    %c1_102 = arith.constant 1 : index
    %c1_103 = arith.constant 1 : index
    %c0_104 = arith.constant 0 : index
    %85 = vector.load %arg1[%c0_101, %c1_102, %c1_103, %c0_104] : memref<1x4x7x32xbf16, #tpu.memory_space<vmem>>, vector<1x1x6x32xbf16>
    %86 = vector.shape_cast %85 : vector<1x1x6x32xbf16> to vector<6x32xbf16>
    %c3_105 = arith.constant 3 : index
    %c0_106 = arith.constant 0 : index
    %c0_107 = arith.constant 0 : index
    %87 = vector.load %arg2[%c3_105, %c0_106, %c0_107] : memref<5x32x240xbf16, #tpu.memory_space<vmem>>, vector<1x32x240xbf16>
    %88 = vector.shape_cast %87 : vector<1x32x240xbf16> to vector<32x240xbf16>
    %cst_108 = arith.constant dense<0.000000e+00> : vector<6x240xf32>
    %89 = tpu.matmul %86, %88, %cst_108 {dimension_numbers = #tpu.dot_dimension_numbers<[1], [0], [0], [1], [0, 0, 1, 1], [], []>} : vector<6x32xbf16>, vector<32x240xbf16>, vector<6x240xf32> -> vector<6x240xf32>
    %90 = arith.addf %84, %89 : vector<6x240xf32>
    %c0_109 = arith.constant 0 : index
    %c2_110 = arith.constant 2 : index
    %c1_111 = arith.constant 1 : index
    %c0_112 = arith.constant 0 : index
    %91 = vector.load %arg1[%c0_109, %c2_110, %c1_111, %c0_112] : memref<1x4x7x32xbf16, #tpu.memory_space<vmem>>, vector<1x1x6x32xbf16>
    %92 = vector.shape_cast %91 : vector<1x1x6x32xbf16> to vector<6x32xbf16>
    %c4_113 = arith.constant 4 : index
    %c0_114 = arith.constant 0 : index
    %c0_115 = arith.constant 0 : index
    %93 = vector.load %arg2[%c4_113, %c0_114, %c0_115] : memref<5x32x240xbf16, #tpu.memory_space<vmem>>, vector<1x32x240xbf16>
    %94 = vector.shape_cast %93 : vector<1x32x240xbf16> to vector<32x240xbf16>
    %cst_116 = arith.constant dense<0.000000e+00> : vector<6x240xf32>
    %95 = tpu.matmul %92, %94, %cst_116 {dimension_numbers = #tpu.dot_dimension_numbers<[1], [0], [0], [1], [0, 0, 1, 1], [], []>} : vector<6x32xbf16>, vector<32x240xbf16>, vector<6x240xf32> -> vector<6x240xf32>
    %96 = arith.addf %90, %95 : vector<6x240xf32>
    %c0_117 = arith.constant 0 : index
    %c3_118 = arith.constant 3 : index
    %c0_119 = arith.constant 0 : index
    %c0_120 = arith.constant 0 : index
    %97 = vector.load %arg1[%c0_117, %c3_118, %c0_119, %c0_120] : memref<1x4x7x32xbf16, #tpu.memory_space<vmem>>, vector<1x1x6x32xbf16>
    %98 = vector.shape_cast %97 : vector<1x1x6x32xbf16> to vector<6x32xbf16>
    %c0_121 = arith.constant 0 : index
    %c0_122 = arith.constant 0 : index
    %c0_123 = arith.constant 0 : index
    %99 = vector.load %arg2[%c0_121, %c0_122, %c0_123] : memref<5x32x240xbf16, #tpu.memory_space<vmem>>, vector<1x32x240xbf16>
    %100 = vector.shape_cast %99 : vector<1x32x240xbf16> to vector<32x240xbf16>
    %cst_124 = arith.constant dense<0.000000e+00> : vector<6x240xf32>
    %101 = tpu.matmul %98, %100, %cst_124 {dimension_numbers = #tpu.dot_dimension_numbers<[1], [0], [0], [1], [0, 0, 1, 1], [], []>} : vector<6x32xbf16>, vector<32x240xbf16>, vector<6x240xf32> -> vector<6x240xf32>
    %c0_125 = arith.constant 0 : index
    %c0_126 = arith.constant 0 : index
    %c1_127 = arith.constant 1 : index
    %c0_128 = arith.constant 0 : index
    %102 = vector.load %arg1[%c0_125, %c0_126, %c1_127, %c0_128] : memref<1x4x7x32xbf16, #tpu.memory_space<vmem>>, vector<1x1x6x32xbf16>
    %103 = vector.shape_cast %102 : vector<1x1x6x32xbf16> to vector<6x32xbf16>
    %c1_129 = arith.constant 1 : index
    %c0_130 = arith.constant 0 : index
    %c0_131 = arith.constant 0 : index
    %104 = vector.load %arg2[%c1_129, %c0_130, %c0_131] : memref<5x32x240xbf16, #tpu.memory_space<vmem>>, vector<1x32x240xbf16>
    %105 = vector.shape_cast %104 : vector<1x32x240xbf16> to vector<32x240xbf16>
    %cst_132 = arith.constant dense<0.000000e+00> : vector<6x240xf32>
    %106 = tpu.matmul %103, %105, %cst_132 {dimension_numbers = #tpu.dot_dimension_numbers<[1], [0], [0], [1], [0, 0, 1, 1], [], []>} : vector<6x32xbf16>, vector<32x240xbf16>, vector<6x240xf32> -> vector<6x240xf32>
    %107 = arith.addf %101, %106 : vector<6x240xf32>
    %c0_133 = arith.constant 0 : index
    %c1_134 = arith.constant 1 : index
    %c1_135 = arith.constant 1 : index
    %c0_136 = arith.constant 0 : index
    %108 = vector.load %arg1[%c0_133, %c1_134, %c1_135, %c0_136] : memref<1x4x7x32xbf16, #tpu.memory_space<vmem>>, vector<1x1x6x32xbf16>
    %109 = vector.shape_cast %108 : vector<1x1x6x32xbf16> to vector<6x32xbf16>
    %c2_137 = arith.constant 2 : index
    %c0_138 = arith.constant 0 : index
    %c0_139 = arith.constant 0 : index
    %110 = vector.load %arg2[%c2_137, %c0_138, %c0_139] : memref<5x32x240xbf16, #tpu.memory_space<vmem>>, vector<1x32x240xbf16>
    %111 = vector.shape_cast %110 : vector<1x32x240xbf16> to vector<32x240xbf16>
    %cst_140 = arith.constant dense<0.000000e+00> : vector<6x240xf32>
    %112 = tpu.matmul %109, %111, %cst_140 {dimension_numbers = #tpu.dot_dimension_numbers<[1], [0], [0], [1], [0, 0, 1, 1], [], []>} : vector<6x32xbf16>, vector<32x240xbf16>, vector<6x240xf32> -> vector<6x240xf32>
    %113 = arith.addf %107, %112 : vector<6x240xf32>
    %c0_141 = arith.constant 0 : index
    %c2_142 = arith.constant 2 : index
    %c1_143 = arith.constant 1 : index
    %c0_144 = arith.constant 0 : index
    %114 = vector.load %arg1[%c0_141, %c2_142, %c1_143, %c0_144] : memref<1x4x7x32xbf16, #tpu.memory_space<vmem>>, vector<1x1x6x32xbf16>
    %115 = vector.shape_cast %114 : vector<1x1x6x32xbf16> to vector<6x32xbf16>
    %c3_145 = arith.constant 3 : index
    %c0_146 = arith.constant 0 : index
    %c0_147 = arith.constant 0 : index
    %116 = vector.load %arg2[%c3_145, %c0_146, %c0_147] : memref<5x32x240xbf16, #tpu.memory_space<vmem>>, vector<1x32x240xbf16>
    %117 = vector.shape_cast %116 : vector<1x32x240xbf16> to vector<32x240xbf16>
    %cst_148 = arith.constant dense<0.000000e+00> : vector<6x240xf32>
    %118 = tpu.matmul %115, %117, %cst_148 {dimension_numbers = #tpu.dot_dimension_numbers<[1], [0], [0], [1], [0, 0, 1, 1], [], []>} : vector<6x32xbf16>, vector<32x240xbf16>, vector<6x240xf32> -> vector<6x240xf32>
    %119 = arith.addf %113, %118 : vector<6x240xf32>
    %c0_149 = arith.constant 0 : index
    %c3_150 = arith.constant 3 : index
    %c1_151 = arith.constant 1 : index
    %c0_152 = arith.constant 0 : index
    %120 = vector.load %arg1[%c0_149, %c3_150, %c1_151, %c0_152] : memref<1x4x7x32xbf16, #tpu.memory_space<vmem>>, vector<1x1x6x32xbf16>
    %121 = vector.shape_cast %120 : vector<1x1x6x32xbf16> to vector<6x32xbf16>
    %c4_153 = arith.constant 4 : index
    %c0_154 = arith.constant 0 : index
    %c0_155 = arith.constant 0 : index
    %122 = vector.load %arg2[%c4_153, %c0_154, %c0_155] : memref<5x32x240xbf16, #tpu.memory_space<vmem>>, vector<1x32x240xbf16>
    %123 = vector.shape_cast %122 : vector<1x32x240xbf16> to vector<32x240xbf16>
    %cst_156 = arith.constant dense<0.000000e+00> : vector<6x240xf32>
    %124 = tpu.matmul %121, %123, %cst_156 {dimension_numbers = #tpu.dot_dimension_numbers<[1], [0], [0], [1], [0, 0, 1, 1], [], []>} : vector<6x32xbf16>, vector<32x240xbf16>, vector<6x240xf32> -> vector<6x240xf32>
    %125 = arith.addf %119, %124 : vector<6x240xf32>
    %126 = arith.maximumf %96, %125 : vector<6x240xf32>
    %127 = vector.extract_strided_slice %126 {offsets = [0, 0], sizes = [6, 120], strides = [1, 1]} : vector<6x240xf32> to vector<6x120xf32>
    %128 = vector.extract_strided_slice %126 {offsets = [0, 120], sizes = [6, 120], strides = [1, 1]} : vector<6x240xf32> to vector<6x120xf32>
    %129 = arith.maximumf %127, %128 : vector<6x120xf32>
    %c0_157 = arith.constant 0 : index
    %c0_158 = arith.constant 0 : index
    %130 = vector.load %arg3[%c0_157, %c0_158] : memref<1x120xf32, #tpu.memory_space<vmem>>, vector<1x120xf32>
    %131 = vector.broadcast %130 : vector<1x120xf32> to vector<6x120xf32>
    %132 = arith.addf %129, %131 : vector<6x120xf32>
    %cst_159 = arith.constant 0.000000e+00 : f32
    %133 = vector.broadcast %cst_159 : f32 to vector<6x120xf32>
    %134 = arith.maximumf %132, %133 : vector<6x120xf32>
    %135 = arith.truncf %134 : vector<6x120xf32> to vector<6x120xbf16>
    %136 = vector.extract_strided_slice %67 {offsets = [0, 0], sizes = [4, 120], strides = [1, 1]} : vector<6x120xbf16> to vector<4x120xbf16>
    %c0_160 = arith.constant 0 : index
    %c0_161 = arith.constant 0 : index
    %c0_162 = arith.constant 0 : index
    %137 = vector.load %arg4[%c0_160, %c0_161, %c0_162] : memref<5x120x160xbf16, #tpu.memory_space<vmem>>, vector<1x120x160xbf16>
    %138 = vector.shape_cast %137 : vector<1x120x160xbf16> to vector<120x160xbf16>
    %cst_163 = arith.constant dense<0.000000e+00> : vector<4x160xf32>
    %139 = tpu.matmul %136, %138, %cst_163 {dimension_numbers = #tpu.dot_dimension_numbers<[1], [0], [0], [1], [0, 0, 1, 1], [], []>} : vector<4x120xbf16>, vector<120x160xbf16>, vector<4x160xf32> -> vector<4x160xf32>
    %140 = vector.extract_strided_slice %135 {offsets = [0, 0], sizes = [4, 120], strides = [1, 1]} : vector<6x120xbf16> to vector<4x120xbf16>
    %c1_164 = arith.constant 1 : index
    %c0_165 = arith.constant 0 : index
    %c0_166 = arith.constant 0 : index
    %141 = vector.load %arg4[%c1_164, %c0_165, %c0_166] : memref<5x120x160xbf16, #tpu.memory_space<vmem>>, vector<1x120x160xbf16>
    %142 = vector.shape_cast %141 : vector<1x120x160xbf16> to vector<120x160xbf16>
    %cst_167 = arith.constant dense<0.000000e+00> : vector<4x160xf32>
    %143 = tpu.matmul %140, %142, %cst_167 {dimension_numbers = #tpu.dot_dimension_numbers<[1], [0], [0], [1], [0, 0, 1, 1], [], []>} : vector<4x120xbf16>, vector<120x160xbf16>, vector<4x160xf32> -> vector<4x160xf32>
    %144 = arith.addf %139, %143 : vector<4x160xf32>
    %145 = vector.extract_strided_slice %67 {offsets = [1, 0], sizes = [4, 120], strides = [1, 1]} : vector<6x120xbf16> to vector<4x120xbf16>
    %c2_168 = arith.constant 2 : index
    %c0_169 = arith.constant 0 : index
    %c0_170 = arith.constant 0 : index
    %146 = vector.load %arg4[%c2_168, %c0_169, %c0_170] : memref<5x120x160xbf16, #tpu.memory_space<vmem>>, vector<1x120x160xbf16>
    %147 = vector.shape_cast %146 : vector<1x120x160xbf16> to vector<120x160xbf16>
    %cst_171 = arith.constant dense<0.000000e+00> : vector<4x160xf32>
    %148 = tpu.matmul %145, %147, %cst_171 {dimension_numbers = #tpu.dot_dimension_numbers<[1], [0], [0], [1], [0, 0, 1, 1], [], []>} : vector<4x120xbf16>, vector<120x160xbf16>, vector<4x160xf32> -> vector<4x160xf32>
    %149 = arith.addf %144, %148 : vector<4x160xf32>
    %150 = vector.extract_strided_slice %135 {offsets = [1, 0], sizes = [4, 120], strides = [1, 1]} : vector<6x120xbf16> to vector<4x120xbf16>
    %c3_172 = arith.constant 3 : index
    %c0_173 = arith.constant 0 : index
    %c0_174 = arith.constant 0 : index
    %151 = vector.load %arg4[%c3_172, %c0_173, %c0_174] : memref<5x120x160xbf16, #tpu.memory_space<vmem>>, vector<1x120x160xbf16>
    %152 = vector.shape_cast %151 : vector<1x120x160xbf16> to vector<120x160xbf16>
    %cst_175 = arith.constant dense<0.000000e+00> : vector<4x160xf32>
    %153 = tpu.matmul %150, %152, %cst_175 {dimension_numbers = #tpu.dot_dimension_numbers<[1], [0], [0], [1], [0, 0, 1, 1], [], []>} : vector<4x120xbf16>, vector<120x160xbf16>, vector<4x160xf32> -> vector<4x160xf32>
    %154 = arith.addf %149, %153 : vector<4x160xf32>
    %155 = vector.extract_strided_slice %67 {offsets = [2, 0], sizes = [4, 120], strides = [1, 1]} : vector<6x120xbf16> to vector<4x120xbf16>
    %c4_176 = arith.constant 4 : index
    %c0_177 = arith.constant 0 : index
    %c0_178 = arith.constant 0 : index
    %156 = vector.load %arg4[%c4_176, %c0_177, %c0_178] : memref<5x120x160xbf16, #tpu.memory_space<vmem>>, vector<1x120x160xbf16>
    %157 = vector.shape_cast %156 : vector<1x120x160xbf16> to vector<120x160xbf16>
    %cst_179 = arith.constant dense<0.000000e+00> : vector<4x160xf32>
    %158 = tpu.matmul %155, %157, %cst_179 {dimension_numbers = #tpu.dot_dimension_numbers<[1], [0], [0], [1], [0, 0, 1, 1], [], []>} : vector<4x120xbf16>, vector<120x160xbf16>, vector<4x160xf32> -> vector<4x160xf32>
    %159 = arith.addf %154, %158 : vector<4x160xf32>
    %160 = vector.extract_strided_slice %135 {offsets = [0, 0], sizes = [4, 120], strides = [1, 1]} : vector<6x120xbf16> to vector<4x120xbf16>
    %c0_180 = arith.constant 0 : index
    %c0_181 = arith.constant 0 : index
    %c0_182 = arith.constant 0 : index
    %161 = vector.load %arg4[%c0_180, %c0_181, %c0_182] : memref<5x120x160xbf16, #tpu.memory_space<vmem>>, vector<1x120x160xbf16>
    %162 = vector.shape_cast %161 : vector<1x120x160xbf16> to vector<120x160xbf16>
    %cst_183 = arith.constant dense<0.000000e+00> : vector<4x160xf32>
    %163 = tpu.matmul %160, %162, %cst_183 {dimension_numbers = #tpu.dot_dimension_numbers<[1], [0], [0], [1], [0, 0, 1, 1], [], []>} : vector<4x120xbf16>, vector<120x160xbf16>, vector<4x160xf32> -> vector<4x160xf32>
    %164 = vector.extract_strided_slice %67 {offsets = [1, 0], sizes = [4, 120], strides = [1, 1]} : vector<6x120xbf16> to vector<4x120xbf16>
    %c1_184 = arith.constant 1 : index
    %c0_185 = arith.constant 0 : index
    %c0_186 = arith.constant 0 : index
    %165 = vector.load %arg4[%c1_184, %c0_185, %c0_186] : memref<5x120x160xbf16, #tpu.memory_space<vmem>>, vector<1x120x160xbf16>
    %166 = vector.shape_cast %165 : vector<1x120x160xbf16> to vector<120x160xbf16>
    %cst_187 = arith.constant dense<0.000000e+00> : vector<4x160xf32>
    %167 = tpu.matmul %164, %166, %cst_187 {dimension_numbers = #tpu.dot_dimension_numbers<[1], [0], [0], [1], [0, 0, 1, 1], [], []>} : vector<4x120xbf16>, vector<120x160xbf16>, vector<4x160xf32> -> vector<4x160xf32>
    %168 = arith.addf %163, %167 : vector<4x160xf32>
    %169 = vector.extract_strided_slice %135 {offsets = [1, 0], sizes = [4, 120], strides = [1, 1]} : vector<6x120xbf16> to vector<4x120xbf16>
    %c2_188 = arith.constant 2 : index
    %c0_189 = arith.constant 0 : index
    %c0_190 = arith.constant 0 : index
    %170 = vector.load %arg4[%c2_188, %c0_189, %c0_190] : memref<5x120x160xbf16, #tpu.memory_space<vmem>>, vector<1x120x160xbf16>
    %171 = vector.shape_cast %170 : vector<1x120x160xbf16> to vector<120x160xbf16>
    %cst_191 = arith.constant dense<0.000000e+00> : vector<4x160xf32>
    %172 = tpu.matmul %169, %171, %cst_191 {dimension_numbers = #tpu.dot_dimension_numbers<[1], [0], [0], [1], [0, 0, 1, 1], [], []>} : vector<4x120xbf16>, vector<120x160xbf16>, vector<4x160xf32> -> vector<4x160xf32>
    %173 = arith.addf %168, %172 : vector<4x160xf32>
    %174 = vector.extract_strided_slice %67 {offsets = [2, 0], sizes = [4, 120], strides = [1, 1]} : vector<6x120xbf16> to vector<4x120xbf16>
    %c3_192 = arith.constant 3 : index
    %c0_193 = arith.constant 0 : index
    %c0_194 = arith.constant 0 : index
    %175 = vector.load %arg4[%c3_192, %c0_193, %c0_194] : memref<5x120x160xbf16, #tpu.memory_space<vmem>>, vector<1x120x160xbf16>
    %176 = vector.shape_cast %175 : vector<1x120x160xbf16> to vector<120x160xbf16>
    %cst_195 = arith.constant dense<0.000000e+00> : vector<4x160xf32>
    %177 = tpu.matmul %174, %176, %cst_195 {dimension_numbers = #tpu.dot_dimension_numbers<[1], [0], [0], [1], [0, 0, 1, 1], [], []>} : vector<4x120xbf16>, vector<120x160xbf16>, vector<4x160xf32> -> vector<4x160xf32>
    %178 = arith.addf %173, %177 : vector<4x160xf32>
    %179 = vector.extract_strided_slice %135 {offsets = [2, 0], sizes = [4, 120], strides = [1, 1]} : vector<6x120xbf16> to vector<4x120xbf16>
    %c4_196 = arith.constant 4 : index
    %c0_197 = arith.constant 0 : index
    %c0_198 = arith.constant 0 : index
    %180 = vector.load %arg4[%c4_196, %c0_197, %c0_198] : memref<5x120x160xbf16, #tpu.memory_space<vmem>>, vector<1x120x160xbf16>
    %181 = vector.shape_cast %180 : vector<1x120x160xbf16> to vector<120x160xbf16>
    %cst_199 = arith.constant dense<0.000000e+00> : vector<4x160xf32>
    %182 = tpu.matmul %179, %181, %cst_199 {dimension_numbers = #tpu.dot_dimension_numbers<[1], [0], [0], [1], [0, 0, 1, 1], [], []>} : vector<4x120xbf16>, vector<120x160xbf16>, vector<4x160xf32> -> vector<4x160xf32>
    %183 = arith.addf %178, %182 : vector<4x160xf32>
    %184 = arith.maximumf %159, %183 : vector<4x160xf32>
    %185 = vector.extract_strided_slice %184 {offsets = [0, 0], sizes = [4, 80], strides = [1, 1]} : vector<4x160xf32> to vector<4x80xf32>
    %186 = vector.extract_strided_slice %184 {offsets = [0, 80], sizes = [4, 80], strides = [1, 1]} : vector<4x160xf32> to vector<4x80xf32>
    %187 = arith.maximumf %185, %186 : vector<4x80xf32>
    %c0_200 = arith.constant 0 : index
    %c0_201 = arith.constant 0 : index
    %188 = vector.load %arg5[%c0_200, %c0_201] : memref<1x80xf32, #tpu.memory_space<vmem>>, vector<1x80xf32>
    %189 = vector.broadcast %188 : vector<1x80xf32> to vector<4x80xf32>
    %190 = arith.addf %187, %189 : vector<4x80xf32>
    %cst_202 = arith.constant 0.000000e+00 : f32
    %191 = vector.broadcast %cst_202 : f32 to vector<4x80xf32>
    %192 = arith.maximumf %190, %191 : vector<4x80xf32>
    %193 = arith.truncf %192 : vector<4x80xf32> to vector<4x80xbf16>
    %194 = vector.extract_strided_slice %193 {offsets = [0, 0], sizes = [1, 80], strides = [1, 1]} : vector<4x80xbf16> to vector<1x80xbf16>
    %c0_203 = arith.constant 0 : index
    %c0_204 = arith.constant 0 : index
    %c0_205 = arith.constant 0 : index
    %195 = vector.load %arg6[%c0_203, %c0_204, %c0_205] : memref<4x80x50xbf16, #tpu.memory_space<vmem>>, vector<1x80x50xbf16>
    %196 = vector.shape_cast %195 : vector<1x80x50xbf16> to vector<80x50xbf16>
    %cst_206 = arith.constant dense<0.000000e+00> : vector<1x50xf32>
    %197 = tpu.matmul %194, %196, %cst_206 {dimension_numbers = #tpu.dot_dimension_numbers<[1], [0], [0], [1], [0, 0, 1, 1], [], []>} : vector<1x80xbf16>, vector<80x50xbf16>, vector<1x50xf32> -> vector<1x50xf32>
    %198 = vector.extract_strided_slice %193 {offsets = [1, 0], sizes = [1, 80], strides = [1, 1]} : vector<4x80xbf16> to vector<1x80xbf16>
    %c1_207 = arith.constant 1 : index
    %c0_208 = arith.constant 0 : index
    %c0_209 = arith.constant 0 : index
    %199 = vector.load %arg6[%c1_207, %c0_208, %c0_209] : memref<4x80x50xbf16, #tpu.memory_space<vmem>>, vector<1x80x50xbf16>
    %200 = vector.shape_cast %199 : vector<1x80x50xbf16> to vector<80x50xbf16>
    %cst_210 = arith.constant dense<0.000000e+00> : vector<1x50xf32>
    %201 = tpu.matmul %198, %200, %cst_210 {dimension_numbers = #tpu.dot_dimension_numbers<[1], [0], [0], [1], [0, 0, 1, 1], [], []>} : vector<1x80xbf16>, vector<80x50xbf16>, vector<1x50xf32> -> vector<1x50xf32>
    %202 = arith.addf %197, %201 : vector<1x50xf32>
    %203 = vector.extract_strided_slice %193 {offsets = [2, 0], sizes = [1, 80], strides = [1, 1]} : vector<4x80xbf16> to vector<1x80xbf16>
    %c2_211 = arith.constant 2 : index
    %c0_212 = arith.constant 0 : index
    %c0_213 = arith.constant 0 : index
    %204 = vector.load %arg6[%c2_211, %c0_212, %c0_213] : memref<4x80x50xbf16, #tpu.memory_space<vmem>>, vector<1x80x50xbf16>
    %205 = vector.shape_cast %204 : vector<1x80x50xbf16> to vector<80x50xbf16>
    %cst_214 = arith.constant dense<0.000000e+00> : vector<1x50xf32>
    %206 = tpu.matmul %203, %205, %cst_214 {dimension_numbers = #tpu.dot_dimension_numbers<[1], [0], [0], [1], [0, 0, 1, 1], [], []>} : vector<1x80xbf16>, vector<80x50xbf16>, vector<1x50xf32> -> vector<1x50xf32>
    %207 = arith.addf %202, %206 : vector<1x50xf32>
    %208 = vector.extract_strided_slice %193 {offsets = [3, 0], sizes = [1, 80], strides = [1, 1]} : vector<4x80xbf16> to vector<1x80xbf16>
    %c3_215 = arith.constant 3 : index
    %c0_216 = arith.constant 0 : index
    %c0_217 = arith.constant 0 : index
    %209 = vector.load %arg6[%c3_215, %c0_216, %c0_217] : memref<4x80x50xbf16, #tpu.memory_space<vmem>>, vector<1x80x50xbf16>
    %210 = vector.shape_cast %209 : vector<1x80x50xbf16> to vector<80x50xbf16>
    %cst_218 = arith.constant dense<0.000000e+00> : vector<1x50xf32>
    %211 = tpu.matmul %208, %210, %cst_218 {dimension_numbers = #tpu.dot_dimension_numbers<[1], [0], [0], [1], [0, 0, 1, 1], [], []>} : vector<1x80xbf16>, vector<80x50xbf16>, vector<1x50xf32> -> vector<1x50xf32>
    %212 = arith.addf %207, %211 : vector<1x50xf32>
    %c0_219 = arith.constant 0 : index
    %c0_220 = arith.constant 0 : index
    %213 = vector.load %arg7[%c0_219, %c0_220] : memref<1x50xf32, #tpu.memory_space<vmem>>, vector<1x50xf32>
    %214 = arith.addf %212, %213 : vector<1x50xf32>
    %cst_221 = arith.constant 0.000000e+00 : f32
    %215 = vector.broadcast %cst_221 : f32 to vector<1x50xf32>
    %216 = arith.maximumf %214, %215 : vector<1x50xf32>
    %217 = arith.truncf %216 : vector<1x50xf32> to vector<1x50xbf16>
    %c0_222 = arith.constant 0 : index
    %c0_223 = arith.constant 0 : index
    %218 = vector.load %arg8[%c0_222, %c0_223] : memref<50x10xbf16, #tpu.memory_space<vmem>>, vector<50x10xbf16>
    %cst_224 = arith.constant dense<0.000000e+00> : vector<1x10xf32>
    %219 = tpu.matmul %217, %218, %cst_224 {dimension_numbers = #tpu.dot_dimension_numbers<[1], [0], [0], [1], [0, 0, 1, 1], [], []>} : vector<1x50xbf16>, vector<50x10xbf16>, vector<1x10xf32> -> vector<1x10xf32>
    %c0_225 = arith.constant 0 : index
    %c0_226 = arith.constant 0 : index
    %220 = vector.load %arg9[%c0_225, %c0_226] : memref<1x10xf32, #tpu.memory_space<vmem>>, vector<1x10xf32>
    %221 = arith.addf %219, %220 : vector<1x10xf32>
    %cst_227 = arith.constant dense<0xFF800000> : vector<1xf32>
    %222 = vector.multi_reduction <maximumf>, %221, %cst_227 [1] : vector<1x10xf32> to vector<1xf32>
    %223 = vector.shape_cast %222 : vector<1xf32> to vector<1x1xf32>
    %224 = vector.broadcast %223 : vector<1x1xf32> to vector<1x10xf32>
    %225 = arith.subf %221, %224 : vector<1x10xf32>
    %226 = math.exp %225 : vector<1x10xf32>
    %cst_228 = arith.constant dense<0.000000e+00> : vector<1xf32>
    %227 = vector.multi_reduction <add>, %226, %cst_228 [1] : vector<1x10xf32> to vector<1xf32>
    %228 = vector.shape_cast %227 : vector<1xf32> to vector<1x1xf32>
    %229 = math.log %228 : vector<1x1xf32>
    %230 = vector.broadcast %229 : vector<1x1xf32> to vector<1x10xf32>
    %231 = arith.subf %225, %230 : vector<1x10xf32>
    %c0_229 = arith.constant 0 : index
    %c0_230 = arith.constant 0 : index
    %c0_231 = arith.constant 0 : index
    %232 = vector.load %arg10[%c0_229, %c0_230, %c0_231] : memref<1x1x10xf32, #tpu.memory_space<vmem>>, vector<1x1x10xf32>
    %233 = vector.shape_cast %232 : vector<1x1x10xf32> to vector<1x10xf32>
    %234 = vector.shape_cast %231 : vector<1x10xf32> to vector<1x1x10xf32>
    tpu.vector_store %arg10[%c0_229, %c0_230, %c0_231], %234 {strides = array<i32>} : memref<1x1x10xf32, #tpu.memory_space<vmem>>, vector<1x1x10xf32>,
    return
  }
  func.func @transform_0(%arg0: i32) -> (i32, i32, i32, i32) {
    %c0_i32 = arith.constant 0 : i32
    %c0_i32_0 = arith.constant 0 : i32
    %c0_i32_1 = arith.constant 0 : i32
    %c0_i32_2 = arith.constant 0 : i32
    return %arg0, %c0_i32, %c0_i32_0, %c0_i32_1 : i32, i32, i32, i32
  }
  func.func @transform_1(%arg0: i32) -> (i32, i32, i32) {
    %c0_i32 = arith.constant 0 : i32
    %c0_i32_0 = arith.constant 0 : i32
    %c0_i32_1 = arith.constant 0 : i32
    %c0_i32_2 = arith.constant 0 : i32
    return %c0_i32, %c0_i32_0, %c0_i32_1 : i32, i32, i32
  }
  func.func @transform_2(%arg0: i32) -> (i32, i32) {
    %c0_i32 = arith.constant 0 : i32
    %c0_i32_0 = arith.constant 0 : i32
    %c0_i32_1 = arith.constant 0 : i32
    return %c0_i32, %c0_i32_0 : i32, i32
  }
  func.func @transform_3(%arg0: i32) -> (i32, i32, i32) {
    %c0_i32 = arith.constant 0 : i32
    %c0_i32_0 = arith.constant 0 : i32
    %c0_i32_1 = arith.constant 0 : i32
    %c0_i32_2 = arith.constant 0 : i32
    return %c0_i32, %c0_i32_0, %c0_i32_1 : i32, i32, i32
  }
  func.func @transform_4(%arg0: i32) -> (i32, i32) {
    %c0_i32 = arith.constant 0 : i32
    %c0_i32_0 = arith.constant 0 : i32
    %c0_i32_1 = arith.constant 0 : i32
    return %c0_i32, %c0_i32_0 : i32, i32
  }
  func.func @transform_5(%arg0: i32) -> (i32, i32, i32) {
    %c0_i32 = arith.constant 0 : i32
    %c0_i32_0 = arith.constant 0 : i32
    %c0_i32_1 = arith.constant 0 : i32
    %c0_i32_2 = arith.constant 0 : i32
    return %c0_i32, %c0_i32_0, %c0_i32_1 : i32, i32, i32
  }
  func.func @transform_6(%arg0: i32) -> (i32, i32) {
    %c0_i32 = arith.constant 0 : i32
    %c0_i32_0 = arith.constant 0 : i32
    %c0_i32_1 = arith.constant 0 : i32
    return %c0_i32, %c0_i32_0 : i32, i32
  }
  func.func @transform_7(%arg0: i32) -> (i32, i32) {
    %c0_i32 = arith.constant 0 : i32
    %c0_i32_0 = arith.constant 0 : i32
    %c0_i32_1 = arith.constant 0 : i32
    return %c0_i32, %c0_i32_0 : i32, i32
  }
  func.func @transform_8(%arg0: i32) -> (i32, i32) {
    %c0_i32 = arith.constant 0 : i32
    %c0_i32_0 = arith.constant 0 : i32
    %c0_i32_1 = arith.constant 0 : i32
    return %c0_i32, %c0_i32_0 : i32, i32
  }
  func.func @transform_9(%arg0: i32) -> (i32, i32, i32) {
    %c0_i32 = arith.constant 0 : i32
    %c0_i32_0 = arith.constant 0 : i32
    %c0_i32_1 = arith.constant 0 : i32
    return %arg0, %c0_i32, %c0_i32_0 : i32, i32, i32
  }
}

</mosaic_0001>

<llo_original>
// kernel: net_forward.1
$region0: #{net_forward.1}
  #allocation0 [shape = 'u32[]', space=smem, size = 0x4, offset = 0x4, fixed_abs, tag = 'smem constant byte address 0x4 - core index']
  #allocation1 [shape = 'u32[72,128]{1,0:T(1,128)}', space=vmem, size = 0x9000, scoped, tag = 'internal scratch']
  %s0 = inlined_call_operand.vmem [shape: bf16[2,4,7,32], index: 0, kind: input, shape index: {}]
  %s1 = inlined_call_operand.vmem [shape: bf16[5,32,240], index: 1, kind: input, shape index: {}]
  %s2 = inlined_call_operand.vmem [shape: f32[1,120], index: 2, kind: input, shape index: {}]
  %s3 = inlined_call_operand.vmem [shape: bf16[5,120,160], index: 3, kind: input, shape index: {}]
  %s4 = inlined_call_operand.vmem [shape: f32[1,80], index: 4, kind: input, shape index: {}]
  %s5 = inlined_call_operand.vmem [shape: bf16[4,80,50], index: 5, kind: input, shape index: {}]
  %s6 = inlined_call_operand.vmem [shape: f32[1,50], index: 6, kind: input, shape index: {}]
  %s7 = inlined_call_operand.vmem [shape: bf16[50,10], index: 7, kind: input, shape index: {}]
  %s8 = inlined_call_operand.vmem [shape: f32[1,10], index: 8, kind: input, shape index: {}]
  %s9 = inlined_call_operand.hbm [shape: f32[2,1,10], index: 9, kind: output, shape index: {}]
  %s10 = sld [smem:[#allocation0]]
  $region69: #{net_forward.1} parent=0
    _
  %s12 = ssub.s32 1, %s10
  %s13 = scalar_select 0, %s12, %s10
  $region1: #{net_forward.1} parent=0
    #allocation2 [shape = 'u8[1024]{0}', space=vmem, size = 0x400, scoped, tag = 'output window, operand 0']
    #allocation3 [shape = 's32[2]{0}', space=sflag, size = 0x8, scoped, tag = 'scoped memory for net_forward.1']
    %14 = vsyncpa [#allocation3], 0
    %s15 = scalar_lea.sflag [#allocation3], 1
    %16 = vsyncpa %s15, 0
    loop: start=0, step=1, limit=4
    $region2: #{net_forward.1} parent=1 // loop_pre_header
      _
    $region3: #{net_forward.1} parent=1 // loop_header
      %s18 = sphi 0, %s22
      %p19 = scmp.ge.s32.totalorder %s18, 4
      %s28 = sphi 0, %s30
      %s31 = sphi 0, %s28
      %s32 = sphi 0, %s31
      %s48 = sphi 0, %s32
      %s52 = sphi 0, %s52
      %s54 = sphi 0, %s52
      %s55 = sphi 0, %s54
      %s69 = sphi 0, %s55
      %s73 = sphi 0, %s73
      %s75 = sphi 0, %s73
      %s76 = sphi 0, %s75
      %s90 = sphi 0, %s76
      %s94 = sphi 0, %s94
      %s96 = sphi 0, %s94
      %s97 = sphi 0, %s96
      %s111 = sphi 0, %s97
      %s115 = sphi 0, %s115
      %s117 = sphi 0, %s115
      %s118 = sphi 0, %s117
      %s132 = sphi 0, %s118
      %s136 = sphi 0, %s136
      %s138 = sphi 0, %s136
      %s139 = sphi 0, %s138
      %s153 = sphi 0, %s139
      %s157 = sphi 0, %s157
      %s159 = sphi 0, %s157
      %s160 = sphi 0, %s159
      %s174 = sphi 0, %s160
      %s178 = sphi 0, %s178
      %s180 = sphi 0, %s178
      %s181 = sphi 0, %s180
      %s195 = sphi 0, %s181
      %s199 = sphi 0, %s199
      %s201 = sphi 0, %s199
      %s202 = sphi 0, %s201
      %s216 = sphi 0, %s202
      %s222 = sphi 0, %s224
      %s225 = sphi 0, %s222
      %s226 = sphi 0, %s225
      %s242 = sphi 0, %s226
    $region4: #{net_forward.1} parent=1 // loop_header_branch
      %21 = sbr.rel (%p19) target = $region8
    $region5: #{net_forward.1} parent=1 // loop_body
      %s23 = ssub.s32 %s18, 1
      %s24 = ssub.s32 %s18, 2
      %s25 = sadd.s32 %s18, 1
      %s26 = ssub.s32 %s18, %s25
      %p27 = scmp.eq.s32.totalorder %s26, 0
      %s29 = sadd.s32 %s28, 1
      %s30 = scalar_select %p27, %s28, %s29
      %p33 = pneg %p27
      %p34 = scmp.eq.s32.totalorder %s18, 1
      %p35 = por %p33, %p34
      %p36 = scmp.ne.s32.totalorder %s28, %s31
      %p37 = scmp.eq.s32.totalorder %s18, 0
      %p38 = por %p36, %p37
      %p39 = scmp.ne.s32.totalorder %s28, %s31
      %p40 = scmp.eq.s32.totalorder %s23, 1
      %p41 = por %p39, %p40
      %p42 = scmp.ne.s32.totalorder %s31, %s32
      %p43 = scmp.eq.s32.totalorder %s23, 0
      %p44 = por %p42, %p43
      %p45 = scmp.ne.s32.totalorder %s31, %s32
      %p46 = scmp.eq.s32.totalorder %s24, 1
      %p47 = por %p45, %p46
      %p49 = scmp.ne.s32.totalorder %s32, %s48
      %p50 = scmp.eq.s32.totalorder %s24, 0
      %p51 = por %p49, %p50
      %s53 = sadd.s32 %s52, 1
      %p56 = scmp.eq.s32.totalorder %s18, 1
      %p57 = scmp.ne.s32.totalorder %s52, %s54
      %p58 = scmp.eq.s32.totalorder %s18, 0
      %p59 = por %p57, %p58
      %p60 = scmp.ne.s32.totalorder %s52, %s54
      %p61 = scmp.eq.s32.totalorder %s23, 1
      %p62 = por %p60, %p61
      %p63 = scmp.ne.s32.totalorder %s54, %s55
      %p64 = scmp.eq.s32.totalorder %s23, 0
      %p65 = por %p63, %p64
      %p66 = scmp.ne.s32.totalorder %s54, %s55
      %p67 = scmp.eq.s32.totalorder %s24, 1
      %p68 = por %p66, %p67
      %p70 = scmp.ne.s32.totalorder %s55, %s69
      %p71 = scmp.eq.s32.totalorder %s24, 0
      %p72 = por %p70, %p71
      %s74 = sadd.s32 %s73, 1
      %p77 = scmp.eq.s32.totalorder %s18, 1
      %p78 = scmp.ne.s32.totalorder %s73, %s75
      %p79 = scmp.eq.s32.totalorder %s18, 0
      %p80 = por %p78, %p79
      %p81 = scmp.ne.s32.totalorder %s73, %s75
      %p82 = scmp.eq.s32.totalorder %s23, 1
      %p83 = por %p81, %p82
      %p84 = scmp.ne.s32.totalorder %s75, %s76
      %p85 = scmp.eq.s32.totalorder %s23, 0
      %p86 = por %p84, %p85
      %p87 = scmp.ne.s32.totalorder %s75, %s76
      %p88 = scmp.eq.s32.totalorder %s24, 1
      %p89 = por %p87, %p88
      %p91 = scmp.ne.s32.totalorder %s76, %s90
      %p92 = scmp.eq.s32.totalorder %s24, 0
      %p93 = por %p91, %p92
      %s95 = sadd.s32 %s94, 1
      %p98 = scmp.eq.s32.totalorder %s18, 1
      %p99 = scmp.ne.s32.totalorder %s94, %s96
      %p100 = scmp.eq.s32.totalorder %s18, 0
      %p101 = por %p99, %p100
      %p102 = scmp.ne.s32.totalorder %s94, %s96
      %p103 = scmp.eq.s32.totalorder %s23, 1
      %p104 = por %p102, %p103
      %p105 = scmp.ne.s32.totalorder %s96, %s97
      %p106 = scmp.eq.s32.totalorder %s23, 0
      %p107 = por %p105, %p106
      %p108 = scmp.ne.s32.totalorder %s96, %s97
      %p109 = scmp.eq.s32.totalorder %s24, 1
      %p110 = por %p108, %p109
      %p112 = scmp.ne.s32.totalorder %s97, %s111
      %p113 = scmp.eq.s32.totalorder %s24, 0
      %p114 = por %p112, %p113
      %s116 = sadd.s32 %s115, 1
      %p119 = scmp.eq.s32.totalorder %s18, 1
      %p120 = scmp.ne.s32.totalorder %s115, %s117
      %p121 = scmp.eq.s32.totalorder %s18, 0
      %p122 = por %p120, %p121
      %p123 = scmp.ne.s32.totalorder %s115, %s117
      %p124 = scmp.eq.s32.totalorder %s23, 1
      %p125 = por %p123, %p124
      %p126 = scmp.ne.s32.totalorder %s117, %s118
      %p127 = scmp.eq.s32.totalorder %s23, 0
      %p128 = por %p126, %p127
      %p129 = scmp.ne.s32.totalorder %s117, %s118
      %p130 = scmp.eq.s32.totalorder %s24, 1
      %p131 = por %p129, %p130
      %p133 = scmp.ne.s32.totalorder %s118, %s132
      %p134 = scmp.eq.s32.totalorder %s24, 0
      %p135 = por %p133, %p134
      %s137 = sadd.s32 %s136, 1
      %p140 = scmp.eq.s32.totalorder %s18, 1
      %p141 = scmp.ne.s32.totalorder %s136, %s138
      %p142 = scmp.eq.s32.totalorder %s18, 0
      %p143 = por %p141, %p142
      %p144 = scmp.ne.s32.totalorder %s136, %s138
      %p145 = scmp.eq.s32.totalorder %s23, 1
      %p146 = por %p144, %p145
      %p147 = scmp.ne.s32.totalorder %s138, %s139
      %p148 = scmp.eq.s32.totalorder %s23, 0
      %p149 = por %p147, %p148
      %p150 = scmp.ne.s32.totalorder %s138, %s139
      %p151 = scmp.eq.s32.totalorder %s24, 1
      %p152 = por %p150, %p151
      %p154 = scmp.ne.s32.totalorder %s139, %s153
      %p155 = scmp.eq.s32.totalorder %s24, 0
      %p156 = por %p154, %p155
      %s158 = sadd.s32 %s157, 1
      %p161 = scmp.eq.s32.totalorder %s18, 1
      %p162 = scmp.ne.s32.totalorder %s157, %s159
      %p163 = scmp.eq.s32.totalorder %s18, 0
      %p164 = por %p162, %p163
      %p165 = scmp.ne.s32.totalorder %s157, %s159
      %p166 = scmp.eq.s32.totalorder %s23, 1
      %p167 = por %p165, %p166
      %p168 = scmp.ne.s32.totalorder %s159, %s160
      %p169 = scmp.eq.s32.totalorder %s23, 0
      %p170 = por %p168, %p169
      %p171 = scmp.ne.s32.totalorder %s159, %s160
      %p172 = scmp.eq.s32.totalorder %s24, 1
      %p173 = por %p171, %p172
      %p175 = scmp.ne.s32.totalorder %s160, %s174
      %p176 = scmp.eq.s32.totalorder %s24, 0
      %p177 = por %p175, %p176
      %s179 = sadd.s32 %s178, 1
      %p182 = scmp.eq.s32.totalorder %s18, 1
      %p183 = scmp.ne.s32.totalorder %s178, %s180
      %p184 = scmp.eq.s32.totalorder %s18, 0
      %p185 = por %p183, %p184
      %p186 = scmp.ne.s32.totalorder %s178, %s180
      %p187 = scmp.eq.s32.totalorder %s23, 1
      %p188 = por %p186, %p187
      %p189 = scmp.ne.s32.totalorder %s180, %s181
      %p190 = scmp.eq.s32.totalorder %s23, 0
      %p191 = por %p189, %p190
      %p192 = scmp.ne.s32.totalorder %s180, %s181
      %p193 = scmp.eq.s32.totalorder %s24, 1
      %p194 = por %p192, %p193
      %p196 = scmp.ne.s32.totalorder %s181, %s195
      %p197 = scmp.eq.s32.totalorder %s24, 0
      %p198 = por %p196, %p197
      %s200 = sadd.s32 %s199, 1
      %p203 = scmp.eq.s32.totalorder %s18, 1
      %p204 = scmp.ne.s32.totalorder %s199, %s201
      %p205 = scmp.eq.s32.totalorder %s18, 0
      %p206 = por %p204, %p205
      %p207 = scmp.ne.s32.totalorder %s199, %s201
      %p208 = scmp.eq.s32.totalorder %s23, 1
      %p209 = por %p207, %p208
      %p210 = scmp.ne.s32.totalorder %s201, %s202
      %p211 = scmp.eq.s32.totalorder %s23, 0
      %p212 = por %p210, %p211
      %p213 = scmp.ne.s32.totalorder %s201, %s202
      %p214 = scmp.eq.s32.totalorder %s24, 1
      %p215 = por %p213, %p214
      %p217 = scmp.ne.s32.totalorder %s202, %s216
      %p218 = scmp.eq.s32.totalorder %s24, 0
      %p219 = por %p217, %p218
      %s220 = ssub.s32 %s18, %s25
      %p221 = scmp.eq.s32.totalorder %s220, 0
      %s223 = sadd.s32 %s222, 1
      %s224 = scalar_select %p221, %s222, %s223
      %p227 = pneg %p221
      %p228 = scmp.eq.s32.totalorder %s18, 1
      %p229 = por %p227, %p228
      %p230 = scmp.ne.s32.totalorder %s222, %s225
      %p231 = scmp.eq.s32.totalorder %s18, 0
      %p232 = por %p230, %p231
      %p233 = scmp.ne.s32.totalorder %s222, %s225
      %p234 = scmp.eq.s32.totalorder %s23, 1
      %p235 = por %p233, %p234
      %p236 = scmp.ne.s32.totalorder %s225, %s226
      %p237 = scmp.eq.s32.totalorder %s23, 0
      %p238 = por %p236, %p237
      %p239 = scmp.ne.s32.totalorder %s225, %s226
      %p240 = scmp.eq.s32.totalorder %s24, 1
      %p241 = por %p239, %p240
      %p243 = scmp.ne.s32.totalorder %s226, %s242
      %p244 = scmp.eq.s32.totalorder %s24, 0
      %p245 = por %p243, %p244
      %p246 = scmp.le.s32.totalorder 1, %s18
      %p247 = scmp.lt.s32.totalorder %s18, 3
      %p248 = pnand %p246, %p247
      %p249 = pneg %p248
      // Predicated region
      $region9: #{net_forward.1} parent=5 // pred_check
        _
      $region10: #{net_forward.1} parent=5 // pred_check_branch
        %251 = sbr.rel (%p248) target = $region12
      $region11: #{net_forward.1} parent=5 // pred_region
        %s252 = ssub.s32 %s18, 1
        // Predicated region
        $region13: #{net_forward.1} parent=11 // pred_check
          %p253 = pneg %p65
        $region14: #{net_forward.1} parent=11 // pred_check_branch
          %255 = sbr.rel (%p253) target = $region16
        $region15: #{net_forward.1} parent=11 // pred_region
          _
        $region16: #{net_forward.1} parent=11 // pred_fallthru
          _
        // Predicated region
        $region17: #{net_forward.1} parent=11 // pred_check
          %p256 = pneg %p86
        $region18: #{net_forward.1} parent=11 // pred_check_branch
          %258 = sbr.rel (%p256) target = $region20
        $region19: #{net_forward.1} parent=11 // pred_region
          _
        $region20: #{net_forward.1} parent=11 // pred_fallthru
          _
        // Predicated region
        $region21: #{net_forward.1} parent=11 // pred_check
          %p259 = pneg %p107
        $region22: #{net_forward.1} parent=11 // pred_check_branch
          %261 = sbr.rel (%p259) target = $region24
        $region23: #{net_forward.1} parent=11 // pred_region
          _
        $region24: #{net_forward.1} parent=11 // pred_fallthru
          _
        // Predicated region
        $region25: #{net_forward.1} parent=11 // pred_check
          %p262 = pneg %p128
        $region26: #{net_forward.1} parent=11 // pred_check_branch
          %264 = sbr.rel (%p262) target = $region28
        $region27: #{net_forward.1} parent=11 // pred_region
          _
        $region28: #{net_forward.1} parent=11 // pred_fallthru
          _
        // Predicated region
        $region29: #{net_forward.1} parent=11 // pred_check
          %p265 = pneg %p149
        $region30: #{net_forward.1} parent=11 // pred_check_branch
          %267 = sbr.rel (%p265) target = $region32
        $region31: #{net_forward.1} parent=11 // pred_region
          _
        $region32: #{net_forward.1} parent=11 // pred_fallthru
          _
        // Predicated region
        $region33: #{net_forward.1} parent=11 // pred_check
          %p268 = pneg %p170
        $region34: #{net_forward.1} parent=11 // pred_check_branch
          %270 = sbr.rel (%p268) target = $region36
        $region35: #{net_forward.1} parent=11 // pred_region
          _
        $region36: #{net_forward.1} parent=11 // pred_fallthru
          _
        // Predicated region
        $region37: #{net_forward.1} parent=11 // pred_check
          %p271 = pneg %p191
        $region38: #{net_forward.1} parent=11 // pred_check_branch
          %273 = sbr.rel (%p271) target = $region40
        $region39: #{net_forward.1} parent=11 // pred_region
          _
        $region40: #{net_forward.1} parent=11 // pred_fallthru
          _
        // Predicated region
        $region41: #{net_forward.1} parent=11 // pred_check
          %p274 = pneg %p212
        $region42: #{net_forward.1} parent=11 // pred_check_branch
          %276 = sbr.rel (%p274) target = $region44
        $region43: #{net_forward.1} parent=11 // pred_region
          _
        $region44: #{net_forward.1} parent=11 // pred_fallthru
          _
      $region12: #{net_forward.1} parent=5 // pred_fallthru
        _
      %p277 = scmp.lt.s32.totalorder %s18, 2
      // Predicated region
      $region45: #{net_forward.1} parent=5 // pred_check
        %p278 = pneg %p277
      $region46: #{net_forward.1} parent=5 // pred_check_branch
        %280 = sbr.rel (%p278) target = $region48
      $region47: #{net_forward.1} parent=5 // pred_region
        // Predicated region
        $region49: #{net_forward.1} parent=47 // pred_check
          %p281 = pneg %p38
        $region50: #{net_forward.1} parent=47 // pred_check_branch
          %283 = sbr.rel (%p281) target = $region52
        $region51: #{net_forward.1} parent=47 // pred_region
          %p284 = scmp.lt.s32.totalorder %s18, 1
          %s285 = scalar_select %p284, %s18, 1
          %s286 = smul.addr %s285, 4
          %s287 = smul.addr %s286, 4
          %s288 = scalar_lea.vmem %s0, %s287
        $region52: #{net_forward.1} parent=47 // pred_fallthru
          _
      $region48: #{net_forward.1} parent=5 // pred_fallthru
        _
      %p289 = scmp.le.s32.totalorder 1, %s18
      %p290 = scmp.lt.s32.totalorder %s18, 3
      %p291 = pnand %p289, %p290
      %p292 = pneg %p291
      // Predicated region
      $region53: #{net_forward.1} parent=5 // pred_check
        _
      $region54: #{net_forward.1} parent=5 // pred_check_branch
        %294 = sbr.rel (%p291) target = $region56
      $region55: #{net_forward.1} parent=5 // pred_region
        %s295 = ssub.s32 %s18, 1
        %p296 = scmp.lt.s32.totalorder %s23, 1
        %s297 = scalar_select %p296, %s23, 1
        %s298 = smul.addr %s297, 4
        %s299 = smul.addr %s298, 4
        %s300 = scalar_lea.vmem %s0, %s299
        %p301 = pneg %p44
        %p302 = pneg %p41
        %p303 = pneg %p65
        %p304 = pneg %p62
        %p305 = pneg %p86
        %p306 = pneg %p83
        %p307 = pneg %p107
        %p308 = pneg %p104
        %p309 = pneg %p128
        %p310 = pneg %p125
        %p311 = pneg %p149
        %p312 = pneg %p146
        %p313 = pneg %p170
        %p314 = pneg %p167
        %p315 = pneg %p191
        %p316 = pneg %p188
        %p317 = pneg %p212
        %p318 = pneg %p209
        %p319 = pneg %p238
        %p320 = pneg %p235
        %s321 = sand.u32 %s225, 1
        %s322 = scalar_lea.sflag [#allocation3], %s321
        %s323 = sand.u32 %s225, 1
        %s324 = scalar_lea.vmem [#allocation2], %s323
        %p325 = scmp.lt.s32.totalorder %s23, 1
        %s326 = scalar_select %p325, %s23, 1
        %s327 = smul.addr %s326, 4
        %s328 = smul.addr %s327, 4
        %s329 = scalar_lea.vmem %s0, %s328
        %v331 = vld [vmem:[%s329] sm:$0x7]
        %v332 = vld [vmem:[%s1] sm:$0xff]
        %v333 = vld [vmem:[%s1 + $0x8] sm:$0xff]
        %v334 = vld [vmem:[%s1 + $0x10] sm:$0xff]
        %v335 = vld [vmem:[%s1 + $0x18] sm:$0xff]
        %s336 = scalar_lea.vmem %s329, 4
        %v337 = vld [vmem:[%s336] sm:$0x7]
        %s338 = scalar_lea.vmem %s1, 32
        %v339 = vld [vmem:[%s338] sm:$0xff]
        %v340 = vld [vmem:[%s338 + $0x8] sm:$0xff]
        %v341 = vld [vmem:[%s338 + $0x10] sm:$0xff]
        %v342 = vld [vmem:[%s338 + $0x18] sm:$0xff]
        %v347 = vunpack.c.l.b16 %v339
        %v348 = vunpack.c.h.b16 %v339
        %v349 = vunpack.c.l.b16 %v340
        %v350 = vunpack.c.h.b16 %v340
        %v351 = vunpack.c.l.b16 %v341
        %v352 = vunpack.c.h.b16 %v341
        %v353 = vunpack.c.l.b16 %v342
        %v354 = vunpack.c.h.b16 %v342
        %v355 = vpack.c.b16 %v349, %v347
        %v356 = vpack.c.b16 %v350, %v348
        %v357 = vpack.c.b16 %v353, %v351
        %v358 = vpack.c.b16 %v354, %v352
        %vm363 = vcmask 261120
        %v365 = vsel %vm363, %v337, 0
        %367 = vmatpush.bf16.msra.mxu0 0
        %368 = vmatpush.bf16.msra.mxu0 0
        %369 = vmatpush.bf16.msra.mxu0 0
        %370 = vmatpush.bf16.msra.mxu0 0
        %371 = vmatpush.bf16.msra.mxu0 0
        %372 = vmatpush.bf16.msra.mxu0 0
        %373 = vmatpush.bf16.msra.mxu0 %v357
        %374 = vmatpush.bf16.msra.mxu0 %v355
        %375 = vmatmul.bf16.gmra.mxu0 %v365
        %v376 = vpop.f32.mrf.mxu0
        %v377 = vadd.f32 0.0, %v376
        %v378 = vpop.f32.mrf.mxu0
        %379 = vdwg.mxu0
        %380 = vmatpush.bf16.msra.mxu0 0
        %381 = vmatpush.bf16.msra.mxu0 0
        %382 = vmatpush.bf16.msra.mxu0 0
        %383 = vmatpush.bf16.msra.mxu0 0
        %384 = vmatpush.bf16.msra.mxu0 0
        %385 = vmatpush.bf16.msra.mxu0 0
        %386 = vmatpush.bf16.msra.mxu0 %v358
        %387 = vmatpush.bf16.msra.mxu0 %v356
        %388 = vmatmul.bf16.gmra.mxu0 %v365
        %v389 = vpop.f32.mrf.mxu0
        %v390 = vadd.f32 0.0, %v389
        %v391 = vpop.f32.mrf.mxu0
        %392 = vdwg.mxu0
        %v397 = vunpack.c.l.b16 %v332
        %v398 = vunpack.c.h.b16 %v332
        %v399 = vunpack.c.l.b16 %v333
        %v400 = vunpack.c.h.b16 %v333
        %v401 = vunpack.c.l.b16 %v334
        %v402 = vunpack.c.h.b16 %v334
        %v403 = vunpack.c.l.b16 %v335
        %v404 = vunpack.c.h.b16 %v335
        %v405 = vpack.c.b16 %v399, %v397
        %v406 = vpack.c.b16 %v400, %v398
        %v407 = vpack.c.b16 %v403, %v401
        %v408 = vpack.c.b16 %v404, %v402
        %v414 = vsel %vm363, %v331, 0
        %416 = vmatpush.bf16.msra.mxu0 0
        %417 = vmatpush.bf16.msra.mxu0 0
        %418 = vmatpush.bf16.msra.mxu0 0
        %419 = vmatpush.bf16.msra.mxu0 0
        %420 = vmatpush.bf16.msra.mxu0 0
        %421 = vmatpush.bf16.msra.mxu0 0
        %422 = vmatpush.bf16.msra.mxu0 %v407
        %423 = vmatpush.bf16.msra.mxu0 %v405
        %424 = vmatmul.bf16.gmra.mxu0 %v414
        %v425 = vpop.f32.mrf.mxu0
        %v426 = vadd.f32 %v377, %v425
        %v427 = vpop.f32.mrf.mxu0
        %428 = vdwg.mxu0
        %429 = vmatpush.bf16.msra.mxu0 0
        %430 = vmatpush.bf16.msra.mxu0 0
        %431 = vmatpush.bf16.msra.mxu0 0
        %432 = vmatpush.bf16.msra.mxu0 0
        %433 = vmatpush.bf16.msra.mxu0 0
        %434 = vmatpush.bf16.msra.mxu0 0
        %435 = vmatpush.bf16.msra.mxu0 %v408
        %436 = vmatpush.bf16.msra.mxu0 %v406
        %437 = vmatmul.bf16.gmra.mxu0 %v414
        %v438 = vpop.f32.mrf.mxu0
        %v439 = vadd.f32 %v390, %v438
        %v440 = vpop.f32.mrf.mxu0
        %441 = vdwg.mxu0
        %s442 = scalar_lea.vmem %s329, 8
        %v443 = vld [vmem:[%s442] sm:$0x7]
        %s444 = scalar_lea.vmem %s1, 64
        %v445 = vld [vmem:[%s444] sm:$0xff]
        %v446 = vld [vmem:[%s444 + $0x8] sm:$0xff]
        %v447 = vld [vmem:[%s444 + $0x10] sm:$0xff]
        %v448 = vld [vmem:[%s444 + $0x18] sm:$0xff]
        %v453 = vunpack.c.l.b16 %v445
        %v454 = vunpack.c.h.b16 %v445
        %v455 = vunpack.c.l.b16 %v446
        %v456 = vunpack.c.h.b16 %v446
        %v457 = vunpack.c.l.b16 %v447
        %v458 = vunpack.c.h.b16 %v447
        %v459 = vunpack.c.l.b16 %v448
        %v460 = vunpack.c.h.b16 %v448
        %v461 = vpack.c.b16 %v455, %v453
        %v462 = vpack.c.b16 %v456, %v454
        %v463 = vpack.c.b16 %v459, %v457
        %v464 = vpack.c.b16 %v460, %v458
        %v470 = vsel %vm363, %v443, 0
        %472 = vmatpush.bf16.msra.mxu0 0
        %473 = vmatpush.bf16.msra.mxu0 0
        %474 = vmatpush.bf16.msra.mxu0 0
        %475 = vmatpush.bf16.msra.mxu0 0
        %476 = vmatpush.bf16.msra.mxu0 0
        %477 = vmatpush.bf16.msra.mxu0 0
        %478 = vmatpush.bf16.msra.mxu0 %v463
        %479 = vmatpush.bf16.msra.mxu0 %v461
        %480 = vmatmul.bf16.gmra.mxu0 %v470
        %v481 = vpop.f32.mrf.mxu0
        %v482 = vadd.f32 0.0, %v481
        %v483 = vpop.f32.mrf.mxu0
        %484 = vdwg.mxu0
        %485 = vmatpush.bf16.msra.mxu0 0
        %486 = vmatpush.bf16.msra.mxu0 0
        %487 = vmatpush.bf16.msra.mxu0 0
        %488 = vmatpush.bf16.msra.mxu0 0
        %489 = vmatpush.bf16.msra.mxu0 0
        %490 = vmatpush.bf16.msra.mxu0 0
        %491 = vmatpush.bf16.msra.mxu0 %v464
        %492 = vmatpush.bf16.msra.mxu0 %v462
        %493 = vmatmul.bf16.gmra.mxu0 %v470
        %v494 = vpop.f32.mrf.mxu0
        %v495 = vadd.f32 0.0, %v494
        %v496 = vpop.f32.mrf.mxu0
        %497 = vdwg.mxu0
        %v498 = vadd.f32 %v426, %v482
        %v499 = vadd.f32 %v439, %v495
        %s500 = scalar_lea.vmem %s329, 12
        %v501 = vld [vmem:[%s500] sm:$0x7]
        %s502 = scalar_lea.vmem %s1, 96
        %v503 = vld [vmem:[%s502] sm:$0xff]
        %v504 = vld [vmem:[%s502 + $0x8] sm:$0xff]
        %v505 = vld [vmem:[%s502 + $0x10] sm:$0xff]
        %v506 = vld [vmem:[%s502 + $0x18] sm:$0xff]
        %v511 = vunpack.c.l.b16 %v503
        %v512 = vunpack.c.h.b16 %v503
        %v513 = vunpack.c.l.b16 %v504
        %v514 = vunpack.c.h.b16 %v504
        %v515 = vunpack.c.l.b16 %v505
        %v516 = vunpack.c.h.b16 %v505
        %v517 = vunpack.c.l.b16 %v506
        %v518 = vunpack.c.h.b16 %v506
        %v519 = vpack.c.b16 %v513, %v511
        %v520 = vpack.c.b16 %v514, %v512
        %v521 = vpack.c.b16 %v517, %v515
        %v522 = vpack.c.b16 %v518, %v516
        %v528 = vsel %vm363, %v501, 0
        %530 = vmatpush.bf16.msra.mxu0 0
        %531 = vmatpush.bf16.msra.mxu0 0
        %532 = vmatpush.bf16.msra.mxu0 0
        %533 = vmatpush.bf16.msra.mxu0 0
        %534 = vmatpush.bf16.msra.mxu0 0
        %535 = vmatpush.bf16.msra.mxu0 0
        %536 = vmatpush.bf16.msra.mxu0 %v521
        %537 = vmatpush.bf16.msra.mxu0 %v519
        %538 = vmatmul.bf16.gmra.mxu0 %v528
        %v539 = vpop.f32.mrf.mxu0
        %v540 = vadd.f32 0.0, %v539
        %v541 = vpop.f32.mrf.mxu0
        %542 = vdwg.mxu0
        %543 = vmatpush.bf16.msra.mxu0 0
        %544 = vmatpush.bf16.msra.mxu0 0
        %545 = vmatpush.bf16.msra.mxu0 0
        %546 = vmatpush.bf16.msra.mxu0 0
        %547 = vmatpush.bf16.msra.mxu0 0
        %548 = vmatpush.bf16.msra.mxu0 0
        %549 = vmatpush.bf16.msra.mxu0 %v522
        %550 = vmatpush.bf16.msra.mxu0 %v520
        %551 = vmatmul.bf16.gmra.mxu0 %v528
        %v552 = vpop.f32.mrf.mxu0
        %v553 = vadd.f32 0.0, %v552
        %v554 = vpop.f32.mrf.mxu0
        %555 = vdwg.mxu0
        %v556 = vadd.f32 %v498, %v540
        %v557 = vadd.f32 %v499, %v553
        %v558 = vld [vmem:[%s329] sm:$0xf]
        %s559 = scalar_lea.vmem %s1, 128
        %v560 = vld [vmem:[%s559] sm:$0xff]
        %v561 = vld [vmem:[%s559 + $0x8] sm:$0xff]
        %v562 = vld [vmem:[%s559 + $0x10] sm:$0xff]
        %v563 = vld [vmem:[%s559 + $0x18] sm:$0xff]
        %v565 = vunpack.c.l.b16 %v558
        %v566 = vpack.c.b16 %v565, %v565
        %v568 = vshrl.u32 %v566, 16
        %v570 = vshll.u32 %v566, 16
        %v572 = vrot.slane %v570, 1
        %v573 = vor.u32 %v568, %v572
        %v578 = vunpack.c.l.b16 %v560
        %v579 = vunpack.c.h.b16 %v560
        %v580 = vunpack.c.l.b16 %v561
        %v581 = vunpack.c.h.b16 %v561
        %v582 = vunpack.c.l.b16 %v562
        %v583 = vunpack.c.h.b16 %v562
        %v584 = vunpack.c.l.b16 %v563
        %v585 = vunpack.c.h.b16 %v563
        %v586 = vpack.c.b16 %v580, %v578
        %v587 = vpack.c.b16 %v581, %v579
        %v588 = vpack.c.b16 %v584, %v582
        %v589 = vpack.c.b16 %v585, %v583
        %v595 = vsel %vm363, %v573, 0
        %597 = vmatpush.bf16.msra.mxu0 0
        %598 = vmatpush.bf16.msra.mxu0 0
        %599 = vmatpush.bf16.msra.mxu0 0
        %600 = vmatpush.bf16.msra.mxu0 0
        %601 = vmatpush.bf16.msra.mxu0 0
        %602 = vmatpush.bf16.msra.mxu0 0
        %603 = vmatpush.bf16.msra.mxu0 %v588
        %604 = vmatpush.bf16.msra.mxu0 %v586
        %605 = vmatmul.bf16.gmra.mxu0 %v595
        %v606 = vpop.f32.mrf.mxu0
        %v607 = vadd.f32 0.0, %v606
        %v608 = vpop.f32.mrf.mxu0
        %609 = vdwg.mxu0
        %610 = vmatpush.bf16.msra.mxu0 0
        %611 = vmatpush.bf16.msra.mxu0 0
        %612 = vmatpush.bf16.msra.mxu0 0
        %613 = vmatpush.bf16.msra.mxu0 0
        %614 = vmatpush.bf16.msra.mxu0 0
        %615 = vmatpush.bf16.msra.mxu0 0
        %616 = vmatpush.bf16.msra.mxu0 %v589
        %617 = vmatpush.bf16.msra.mxu0 %v587
        %618 = vmatmul.bf16.gmra.mxu0 %v595
        %v619 = vpop.f32.mrf.mxu0
        %v620 = vadd.f32 0.0, %v619
        %v621 = vpop.f32.mrf.mxu0
        %622 = vdwg.mxu0
        %v623 = vadd.f32 %v556, %v607
        %v624 = vadd.f32 %v557, %v620
        %625 = vmatpush.bf16.msra.mxu0 0
        %626 = vmatpush.bf16.msra.mxu0 0
        %627 = vmatpush.bf16.msra.mxu0 0
        %628 = vmatpush.bf16.msra.mxu0 0
        %629 = vmatpush.bf16.msra.mxu0 0
        %630 = vmatpush.bf16.msra.mxu0 0
        %631 = vmatpush.bf16.msra.mxu0 %v357
        %632 = vmatpush.bf16.msra.mxu0 %v355
        %633 = vmatmul.bf16.gmra.mxu0 %v470
        %v634 = vpop.f32.mrf.mxu0
        %v635 = vadd.f32 0.0, %v634
        %v636 = vpop.f32.mrf.mxu0
        %637 = vdwg.mxu0
        %638 = vmatpush.bf16.msra.mxu0 0
        %639 = vmatpush.bf16.msra.mxu0 0
        %640 = vmatpush.bf16.msra.mxu0 0
        %641 = vmatpush.bf16.msra.mxu0 0
        %642 = vmatpush.bf16.msra.mxu0 0
        %643 = vmatpush.bf16.msra.mxu0 0
        %644 = vmatpush.bf16.msra.mxu0 %v358
        %645 = vmatpush.bf16.msra.mxu0 %v356
        %646 = vmatmul.bf16.gmra.mxu0 %v470
        %v647 = vpop.f32.mrf.mxu0
        %v648 = vadd.f32 0.0, %v647
        %v649 = vpop.f32.mrf.mxu0
        %650 = vdwg.mxu0
        %651 = vmatpush.bf16.msra.mxu0 0
        %652 = vmatpush.bf16.msra.mxu0 0
        %653 = vmatpush.bf16.msra.mxu0 0
        %654 = vmatpush.bf16.msra.mxu0 0
        %655 = vmatpush.bf16.msra.mxu0 0
        %656 = vmatpush.bf16.msra.mxu0 0
        %657 = vmatpush.bf16.msra.mxu0 %v407
        %658 = vmatpush.bf16.msra.mxu0 %v405
        %659 = vmatmul.bf16.gmra.mxu0 %v365
        %v660 = vpop.f32.mrf.mxu0
        %v661 = vadd.f32 %v635, %v660
        %v662 = vpop.f32.mrf.mxu0
        %663 = vdwg.mxu0
        %664 = vmatpush.bf16.msra.mxu0 0
        %665 = vmatpush.bf16.msra.mxu0 0
        %666 = vmatpush.bf16.msra.mxu0 0
        %667 = vmatpush.bf16.msra.mxu0 0
        %668 = vmatpush.bf16.msra.mxu0 0
        %669 = vmatpush.bf16.msra.mxu0 0
        %670 = vmatpush.bf16.msra.mxu0 %v408
        %671 = vmatpush.bf16.msra.mxu0 %v406
        %672 = vmatmul.bf16.gmra.mxu0 %v365
        %v673 = vpop.f32.mrf.mxu0
        %v674 = vadd.f32 %v648, %v673
        %v675 = vpop.f32.mrf.mxu0
        %676 = vdwg.mxu0
        %677 = vmatpush.bf16.msra.mxu0 0
        %678 = vmatpush.bf16.msra.mxu0 0
        %679 = vmatpush.bf16.msra.mxu0 0
        %680 = vmatpush.bf16.msra.mxu0 0
        %681 = vmatpush.bf16.msra.mxu0 0
        %682 = vmatpush.bf16.msra.mxu0 0
        %683 = vmatpush.bf16.msra.mxu0 %v463
        %684 = vmatpush.bf16.msra.mxu0 %v461
        %685 = vmatmul.bf16.gmra.mxu0 %v528
        %v686 = vpop.f32.mrf.mxu0
        %v687 = vadd.f32 0.0, %v686
        %v688 = vpop.f32.mrf.mxu0
        %689 = vdwg.mxu0
        %690 = vmatpush.bf16.msra.mxu0 0
        %691 = vmatpush.bf16.msra.mxu0 0
        %692 = vmatpush.bf16.msra.mxu0 0
        %693 = vmatpush.bf16.msra.mxu0 0
        %694 = vmatpush.bf16.msra.mxu0 0
        %695 = vmatpush.bf16.msra.mxu0 0
        %696 = vmatpush.bf16.msra.mxu0 %v464
        %697 = vmatpush.bf16.msra.mxu0 %v462
        %698 = vmatmul.bf16.gmra.mxu0 %v528
        %v699 = vpop.f32.mrf.mxu0
        %v700 = vadd.f32 0.0, %v699
        %v701 = vpop.f32.mrf.mxu0
        %702 = vdwg.mxu0
        %v703 = vadd.f32 %v661, %v687
        %v704 = vadd.f32 %v674, %v700
        %705 = vmatpush.bf16.msra.mxu0 0
        %706 = vmatpush.bf16.msra.mxu0 0
        %707 = vmatpush.bf16.msra.mxu0 0
        %708 = vmatpush.bf16.msra.mxu0 0
        %709 = vmatpush.bf16.msra.mxu0 0
        %710 = vmatpush.bf16.msra.mxu0 0
        %711 = vmatpush.bf16.msra.mxu0 %v521
        %712 = vmatpush.bf16.msra.mxu0 %v519
        %713 = vmatmul.bf16.gmra.mxu0 %v595
        %v714 = vpop.f32.mrf.mxu0
        %v715 = vadd.f32 0.0, %v714
        %v716 = vpop.f32.mrf.mxu0
        %717 = vdwg.mxu0
        %718 = vmatpush.bf16.msra.mxu0 0
        %719 = vmatpush.bf16.msra.mxu0 0
        %720 = vmatpush.bf16.msra.mxu0 0
        %721 = vmatpush.bf16.msra.mxu0 0
        %722 = vmatpush.bf16.msra.mxu0 0
        %723 = vmatpush.bf16.msra.mxu0 0
        %724 = vmatpush.bf16.msra.mxu0 %v522
        %725 = vmatpush.bf16.msra.mxu0 %v520
        %726 = vmatmul.bf16.gmra.mxu0 %v595
        %v727 = vpop.f32.mrf.mxu0
        %v728 = vadd.f32 0.0, %v727
        %v729 = vpop.f32.mrf.mxu0
        %730 = vdwg.mxu0
        %v731 = vadd.f32 %v703, %v715
        %v732 = vadd.f32 %v704, %v728
        %v733 = vld [vmem:[%s336] sm:$0xf]
        %v735 = vunpack.c.l.b16 %v733
        %v736 = vpack.c.b16 %v735, %v735
        %v738 = vshrl.u32 %v736, 16
        %v740 = vshll.u32 %v736, 16
        %v742 = vrot.slane %v740, 1
        %v743 = vor.u32 %v738, %v742
        %v745 = vsel %vm363, %v743, 0
        %747 = vmatpush.bf16.msra.mxu0 0
        %748 = vmatpush.bf16.msra.mxu0 0
        %749 = vmatpush.bf16.msra.mxu0 0
        %750 = vmatpush.bf16.msra.mxu0 0
        %751 = vmatpush.bf16.msra.mxu0 0
        %752 = vmatpush.bf16.msra.mxu0 0
        %753 = vmatpush.bf16.msra.mxu0 %v588
        %754 = vmatpush.bf16.msra.mxu0 %v586
        %755 = vmatmul.bf16.gmra.mxu0 %v745
        %v756 = vpop.f32.mrf.mxu0
        %v757 = vadd.f32 0.0, %v756
        %v758 = vpop.f32.mrf.mxu0
        %759 = vdwg.mxu0
        %760 = vmatpush.bf16.msra.mxu0 0
        %761 = vmatpush.bf16.msra.mxu0 0
        %762 = vmatpush.bf16.msra.mxu0 0
        %763 = vmatpush.bf16.msra.mxu0 0
        %764 = vmatpush.bf16.msra.mxu0 0
        %765 = vmatpush.bf16.msra.mxu0 0
        %766 = vmatpush.bf16.msra.mxu0 %v589
        %767 = vmatpush.bf16.msra.mxu0 %v587
        %768 = vmatmul.bf16.gmra.mxu0 %v745
        %v769 = vpop.f32.mrf.mxu0
        %v770 = vadd.f32 0.0, %v769
        %v771 = vpop.f32.mrf.mxu0
        %772 = vdwg.mxu0
        %v773 = vadd.f32 %v731, %v757
        %v774 = vadd.f32 %v732, %v770
        %v775 = vmax.f32 %v623, %v773
        %v776 = vmax.f32 %v624, %v774
        %779 = vrot.lane.b32.xlu0 %v775, 8
        %v780 = vpop.permute.xlu0 %779
        %781 = vrot.lane.b32.xlu0 %v776, 8
        %v782 = vpop.permute.xlu0 %781
        %vm783 = vcmask 64512
        %v784 = vsel %vm783, %v780, %v782
        %v786 = vmax.f32 %v775, %v784
        %v787 = vld [vmem:[%s2] sm:$0x1]
        %v789 = vperm.slane %v787, 0
        %v791 = vadd.f32 %v786, %v789
        %v792 = vmax.f32 %v791, 0.0
        %v793 = vpack.c.bf16 %v792, %v792
        %794 = vmatpush.bf16.msra.mxu0 0
        %795 = vmatpush.bf16.msra.mxu0 0
        %796 = vmatpush.bf16.msra.mxu0 0
        %797 = vmatpush.bf16.msra.mxu0 0
        %798 = vmatpush.bf16.msra.mxu0 0
        %799 = vmatpush.bf16.msra.mxu0 0
        %800 = vmatpush.bf16.msra.mxu0 %v357
        %801 = vmatpush.bf16.msra.mxu0 %v355
        %802 = vmatmul.bf16.gmra.mxu0 %v528
        %v803 = vpop.f32.mrf.mxu0
        %v804 = vadd.f32 0.0, %v803
        %v805 = vpop.f32.mrf.mxu0
        %806 = vdwg.mxu0
        %807 = vmatpush.bf16.msra.mxu0 0
        %808 = vmatpush.bf16.msra.mxu0 0
        %809 = vmatpush.bf16.msra.mxu0 0
        %810 = vmatpush.bf16.msra.mxu0 0
        %811 = vmatpush.bf16.msra.mxu0 0
        %812 = vmatpush.bf16.msra.mxu0 0
        %813 = vmatpush.bf16.msra.mxu0 %v358
        %814 = vmatpush.bf16.msra.mxu0 %v356
        %815 = vmatmul.bf16.gmra.mxu0 %v528
        %v816 = vpop.f32.mrf.mxu0
        %v817 = vadd.f32 0.0, %v816
        %v818 = vpop.f32.mrf.mxu0
        %819 = vdwg.mxu0
        %820 = vmatpush.bf16.msra.mxu0 0
        %821 = vmatpush.bf16.msra.mxu0 0
        %822 = vmatpush.bf16.msra.mxu0 0
        %823 = vmatpush.bf16.msra.mxu0 0
        %824 = vmatpush.bf16.msra.mxu0 0
        %825 = vmatpush.bf16.msra.mxu0 0
        %826 = vmatpush.bf16.msra.mxu0 %v407
        %827 = vmatpush.bf16.msra.mxu0 %v405
        %828 = vmatmul.bf16.gmra.mxu0 %v470
        %v829 = vpop.f32.mrf.mxu0
        %v830 = vadd.f32 %v804, %v829
        %v831 = vpop.f32.mrf.mxu0
        %832 = vdwg.mxu0
        %833 = vmatpush.bf16.msra.mxu0 0
        %834 = vmatpush.bf16.msra.mxu0 0
        %835 = vmatpush.bf16.msra.mxu0 0
        %836 = vmatpush.bf16.msra.mxu0 0
        %837 = vmatpush.bf16.msra.mxu0 0
        %838 = vmatpush.bf16.msra.mxu0 0
        %839 = vmatpush.bf16.msra.mxu0 %v408
        %840 = vmatpush.bf16.msra.mxu0 %v406
        %841 = vmatmul.bf16.gmra.mxu0 %v470
        %v842 = vpop.f32.mrf.mxu0
        %v843 = vadd.f32 %v817, %v842
        %v844 = vpop.f32.mrf.mxu0
        %845 = vdwg.mxu0
        %846 = vmatpush.bf16.msra.mxu0 0
        %847 = vmatpush.bf16.msra.mxu0 0
        %848 = vmatpush.bf16.msra.mxu0 0
        %849 = vmatpush.bf16.msra.mxu0 0
        %850 = vmatpush.bf16.msra.mxu0 0
        %851 = vmatpush.bf16.msra.mxu0 0
        %852 = vmatpush.bf16.msra.mxu0 %v463
        %853 = vmatpush.bf16.msra.mxu0 %v461
        %854 = vmatmul.bf16.gmra.mxu0 %v595
        %v855 = vpop.f32.mrf.mxu0
        %v856 = vadd.f32 0.0, %v855
        %v857 = vpop.f32.mrf.mxu0
        %858 = vdwg.mxu0
        %859 = vmatpush.bf16.msra.mxu0 0
        %860 = vmatpush.bf16.msra.mxu0 0
        %861 = vmatpush.bf16.msra.mxu0 0
        %862 = vmatpush.bf16.msra.mxu0 0
        %863 = vmatpush.bf16.msra.mxu0 0
        %864 = vmatpush.bf16.msra.mxu0 0
        %865 = vmatpush.bf16.msra.mxu0 %v464
        %866 = vmatpush.bf16.msra.mxu0 %v462
        %867 = vmatmul.bf16.gmra.mxu0 %v595
        %v868 = vpop.f32.mrf.mxu0
        %v869 = vadd.f32 0.0, %v868
        %v870 = vpop.f32.mrf.mxu0
        %871 = vdwg.mxu0
        %v872 = vadd.f32 %v830, %v856
        %v873 = vadd.f32 %v843, %v869
        %874 = vmatpush.bf16.msra.mxu0 0
        %875 = vmatpush.bf16.msra.mxu0 0
        %876 = vmatpush.bf16.msra.mxu0 0
        %877 = vmatpush.bf16.msra.mxu0 0
        %878 = vmatpush.bf16.msra.mxu0 0
        %879 = vmatpush.bf16.msra.mxu0 0
        %880 = vmatpush.bf16.msra.mxu0 %v521
        %881 = vmatpush.bf16.msra.mxu0 %v519
        %882 = vmatmul.bf16.gmra.mxu0 %v745
        %v883 = vpop.f32.mrf.mxu0
        %v884 = vadd.f32 0.0, %v883
        %v885 = vpop.f32.mrf.mxu0
        %886 = vdwg.mxu0
        %887 = vmatpush.bf16.msra.mxu0 0
        %888 = vmatpush.bf16.msra.mxu0 0
        %889 = vmatpush.bf16.msra.mxu0 0
        %890 = vmatpush.bf16.msra.mxu0 0
        %891 = vmatpush.bf16.msra.mxu0 0
        %892 = vmatpush.bf16.msra.mxu0 0
        %893 = vmatpush.bf16.msra.mxu0 %v522
        %894 = vmatpush.bf16.msra.mxu0 %v520
        %895 = vmatmul.bf16.gmra.mxu0 %v745
        %v896 = vpop.f32.mrf.mxu0
        %v897 = vadd.f32 0.0, %v896
        %v898 = vpop.f32.mrf.mxu0
        %899 = vdwg.mxu0
        %v900 = vadd.f32 %v872, %v884
        %v901 = vadd.f32 %v873, %v897
        %v902 = vld [vmem:[%s442] sm:$0xf]
        %v904 = vunpack.c.l.b16 %v902
        %v905 = vpack.c.b16 %v904, %v904
        %v907 = vshrl.u32 %v905, 16
        %v909 = vshll.u32 %v905, 16
        %v911 = vrot.slane %v909, 1
        %v912 = vor.u32 %v907, %v911
        %v914 = vsel %vm363, %v912, 0
        %916 = vmatpush.bf16.msra.mxu0 0
        %917 = vmatpush.bf16.msra.mxu0 0
        %918 = vmatpush.bf16.msra.mxu0 0
        %919 = vmatpush.bf16.msra.mxu0 0
        %920 = vmatpush.bf16.msra.mxu0 0
        %921 = vmatpush.bf16.msra.mxu0 0
        %922 = vmatpush.bf16.msra.mxu0 %v588
        %923 = vmatpush.bf16.msra.mxu0 %v586
        %924 = vmatmul.bf16.gmra.mxu0 %v914
        %v925 = vpop.f32.mrf.mxu0
        %v926 = vadd.f32 0.0, %v925
        %v927 = vpop.f32.mrf.mxu0
        %928 = vdwg.mxu0
        %929 = vmatpush.bf16.msra.mxu0 0
        %930 = vmatpush.bf16.msra.mxu0 0
        %931 = vmatpush.bf16.msra.mxu0 0
        %932 = vmatpush.bf16.msra.mxu0 0
        %933 = vmatpush.bf16.msra.mxu0 0
        %934 = vmatpush.bf16.msra.mxu0 0
        %935 = vmatpush.bf16.msra.mxu0 %v589
        %936 = vmatpush.bf16.msra.mxu0 %v587
        %937 = vmatmul.bf16.gmra.mxu0 %v914
        %v938 = vpop.f32.mrf.mxu0
        %v939 = vadd.f32 0.0, %v938
        %v940 = vpop.f32.mrf.mxu0
        %941 = vdwg.mxu0
        %v942 = vadd.f32 %v900, %v926
        %v943 = vadd.f32 %v901, %v939
        %944 = vmatpush.bf16.msra.mxu0 0
        %945 = vmatpush.bf16.msra.mxu0 0
        %946 = vmatpush.bf16.msra.mxu0 0
        %947 = vmatpush.bf16.msra.mxu0 0
        %948 = vmatpush.bf16.msra.mxu0 0
        %949 = vmatpush.bf16.msra.mxu0 0
        %950 = vmatpush.bf16.msra.mxu0 %v357
        %951 = vmatpush.bf16.msra.mxu0 %v355
        %952 = vmatmul.bf16.gmra.mxu0 %v595
        %v953 = vpop.f32.mrf.mxu0
        %v954 = vadd.f32 0.0, %v953
        %v955 = vpop.f32.mrf.mxu0
        %956 = vdwg.mxu0
        %957 = vmatpush.bf16.msra.mxu0 0
        %958 = vmatpush.bf16.msra.mxu0 0
        %959 = vmatpush.bf16.msra.mxu0 0
        %960 = vmatpush.bf16.msra.mxu0 0
        %961 = vmatpush.bf16.msra.mxu0 0
        %962 = vmatpush.bf16.msra.mxu0 0
        %963 = vmatpush.bf16.msra.mxu0 %v358
        %964 = vmatpush.bf16.msra.mxu0 %v356
        %965 = vmatmul.bf16.gmra.mxu0 %v595
        %v966 = vpop.f32.mrf.mxu0
        %v967 = vadd.f32 0.0, %v966
        %v968 = vpop.f32.mrf.mxu0
        %969 = vdwg.mxu0
        %970 = vmatpush.bf16.msra.mxu0 0
        %971 = vmatpush.bf16.msra.mxu0 0
        %972 = vmatpush.bf16.msra.mxu0 0
        %973 = vmatpush.bf16.msra.mxu0 0
        %974 = vmatpush.bf16.msra.mxu0 0
        %975 = vmatpush.bf16.msra.mxu0 0
        %976 = vmatpush.bf16.msra.mxu0 %v407
        %977 = vmatpush.bf16.msra.mxu0 %v405
        %978 = vmatmul.bf16.gmra.mxu0 %v528
        %v979 = vpop.f32.mrf.mxu0
        %v980 = vadd.f32 %v954, %v979
        %v981 = vpop.f32.mrf.mxu0
        %982 = vdwg.mxu0
        %983 = vmatpush.bf16.msra.mxu0 0
        %984 = vmatpush.bf16.msra.mxu0 0
        %985 = vmatpush.bf16.msra.mxu0 0
        %986 = vmatpush.bf16.msra.mxu0 0
        %987 = vmatpush.bf16.msra.mxu0 0
        %988 = vmatpush.bf16.msra.mxu0 0
        %989 = vmatpush.bf16.msra.mxu0 %v408
        %990 = vmatpush.bf16.msra.mxu0 %v406
        %991 = vmatmul.bf16.gmra.mxu0 %v528
        %v992 = vpop.f32.mrf.mxu0
        %v993 = vadd.f32 %v967, %v992
        %v994 = vpop.f32.mrf.mxu0
        %995 = vdwg.mxu0
        %996 = vmatpush.bf16.msra.mxu0 0
        %997 = vmatpush.bf16.msra.mxu0 0
        %998 = vmatpush.bf16.msra.mxu0 0
        %999 = vmatpush.bf16.msra.mxu0 0
        %1000 = vmatpush.bf16.msra.mxu0 0
        %1001 = vmatpush.bf16.msra.mxu0 0
        %1002 = vmatpush.bf16.msra.mxu0 %v463
        %1003 = vmatpush.bf16.msra.mxu0 %v461
        %1004 = vmatmul.bf16.gmra.mxu0 %v745
        %v1005 = vpop.f32.mrf.mxu0
        %v1006 = vadd.f32 0.0, %v1005
        %v1007 = vpop.f32.mrf.mxu0
        %1008 = vdwg.mxu0
        %1009 = vmatpush.bf16.msra.mxu0 0
        %1010 = vmatpush.bf16.msra.mxu0 0
        %1011 = vmatpush.bf16.msra.mxu0 0
        %1012 = vmatpush.bf16.msra.mxu0 0
        %1013 = vmatpush.bf16.msra.mxu0 0
        %1014 = vmatpush.bf16.msra.mxu0 0
        %1015 = vmatpush.bf16.msra.mxu0 %v464
        %1016 = vmatpush.bf16.msra.mxu0 %v462
        %1017 = vmatmul.bf16.gmra.mxu0 %v745
        %v1018 = vpop.f32.mrf.mxu0
        %v1019 = vadd.f32 0.0, %v1018
        %v1020 = vpop.f32.mrf.mxu0
        %1021 = vdwg.mxu0
        %v1022 = vadd.f32 %v980, %v1006
        %v1023 = vadd.f32 %v993, %v1019
        %1024 = vmatpush.bf16.msra.mxu0 0
        %1025 = vmatpush.bf16.msra.mxu0 0
        %1026 = vmatpush.bf16.msra.mxu0 0
        %1027 = vmatpush.bf16.msra.mxu0 0
        %1028 = vmatpush.bf16.msra.mxu0 0
        %1029 = vmatpush.bf16.msra.mxu0 0
        %1030 = vmatpush.bf16.msra.mxu0 %v521
        %1031 = vmatpush.bf16.msra.mxu0 %v519
        %1032 = vmatmul.bf16.gmra.mxu0 %v914
        %v1033 = vpop.f32.mrf.mxu0
        %v1034 = vadd.f32 0.0, %v1033
        %v1035 = vpop.f32.mrf.mxu0
        %1036 = vdwg.mxu0
        %1037 = vmatpush.bf16.msra.mxu0 0
        %1038 = vmatpush.bf16.msra.mxu0 0
        %1039 = vmatpush.bf16.msra.mxu0 0
        %1040 = vmatpush.bf16.msra.mxu0 0
        %1041 = vmatpush.bf16.msra.mxu0 0
        %1042 = vmatpush.bf16.msra.mxu0 0
        %1043 = vmatpush.bf16.msra.mxu0 %v522
        %1044 = vmatpush.bf16.msra.mxu0 %v520
        %1045 = vmatmul.bf16.gmra.mxu0 %v914
        %v1046 = vpop.f32.mrf.mxu0
        %v1047 = vadd.f32 0.0, %v1046
        %v1048 = vpop.f32.mrf.mxu0
        %1049 = vdwg.mxu0
        %v1050 = vadd.f32 %v1022, %v1034
        %v1051 = vadd.f32 %v1023, %v1047
        %v1052 = vld [vmem:[%s500] sm:$0xf]
        %v1054 = vunpack.c.l.b16 %v1052
        %v1055 = vpack.c.b16 %v1054, %v1054
        %v1057 = vshrl.u32 %v1055, 16
        %v1059 = vshll.u32 %v1055, 16
        %v1061 = vrot.slane %v1059, 1
        %v1062 = vor.u32 %v1057, %v1061
        %v1064 = vsel %vm363, %v1062, 0
        %1066 = vmatpush.bf16.msra.mxu0 0
        %1067 = vmatpush.bf16.msra.mxu0 0
        %1068 = vmatpush.bf16.msra.mxu0 0
        %1069 = vmatpush.bf16.msra.mxu0 0
        %1070 = vmatpush.bf16.msra.mxu0 0
        %1071 = vmatpush.bf16.msra.mxu0 0
        %1072 = vmatpush.bf16.msra.mxu0 %v588
        %1073 = vmatpush.bf16.msra.mxu0 %v586
        %1074 = vmatmul.bf16.gmra.mxu0 %v1064
        %v1075 = vpop.f32.mrf.mxu0
        %v1076 = vadd.f32 0.0, %v1075
        %v1077 = vpop.f32.mrf.mxu0
        %1078 = vdwg.mxu0
        %1079 = vmatpush.bf16.msra.mxu0 0
        %1080 = vmatpush.bf16.msra.mxu0 0
        %1081 = vmatpush.bf16.msra.mxu0 0
        %1082 = vmatpush.bf16.msra.mxu0 0
        %1083 = vmatpush.bf16.msra.mxu0 0
        %1084 = vmatpush.bf16.msra.mxu0 0
        %1085 = vmatpush.bf16.msra.mxu0 %v589
        %1086 = vmatpush.bf16.msra.mxu0 %v587
        %1087 = vmatmul.bf16.gmra.mxu0 %v1064
        %v1088 = vpop.f32.mrf.mxu0
        %v1089 = vadd.f32 0.0, %v1088
        %v1090 = vpop.f32.mrf.mxu0
        %1091 = vdwg.mxu0
        %v1092 = vadd.f32 %v1050, %v1076
        %v1093 = vadd.f32 %v1051, %v1089
        %v1094 = vmax.f32 %v942, %v1092
        %v1095 = vmax.f32 %v943, %v1093
        %1098 = vrot.lane.b32.xlu0 %v1094, 8
        %v1099 = vpop.permute.xlu0 %1098
        %1100 = vrot.lane.b32.xlu0 %v1095, 8
        %v1101 = vpop.permute.xlu0 %1100
        %v1102 = vsel %vm783, %v1099, %v1101
        %v1104 = vmax.f32 %v1094, %v1102
        %v1105 = vadd.f32 %v1104, %v789
        %v1106 = vmax.f32 %v1105, 0.0
        %v1107 = vpack.c.bf16 %v1106, %v1106
        %v1108 = vld [vmem:[%s3] sm:$0xff]
        %v1109 = vld [vmem:[%s3 + $0x8] sm:$0xff]
        %v1110 = vld [vmem:[%s3 + $0x10] sm:$0xff]
        %v1111 = vld [vmem:[%s3 + $0x18] sm:$0xff]
        %v1112 = vld [vmem:[%s3 + $0x20] sm:$0xff]
        %v1113 = vld [vmem:[%s3 + $0x28] sm:$0xff]
        %v1114 = vld [vmem:[%s3 + $0x30] sm:$0xff]
        %v1115 = vld [vmem:[%s3 + $0x38] sm:$0xff]
        %v1116 = vld [vmem:[%s3 + $0x40] sm:$0xff]
        %v1117 = vld [vmem:[%s3 + $0x48] sm:$0xff]
        %v1118 = vld [vmem:[%s3 + $0x50] sm:$0xff]
        %v1119 = vld [vmem:[%s3 + $0x58] sm:$0xff]
        %v1120 = vld [vmem:[%s3 + $0x60] sm:$0xff]
        %v1121 = vld [vmem:[%s3 + $0x68] sm:$0xff]
        %v1122 = vld [vmem:[%s3 + $0x70] sm:$0xff]
        %s1123 = scalar_lea.vmem %s3, 120
        %v1124 = vld [vmem:[%s1123] sm:$0xff]
        %v1125 = vld [vmem:[%s1123 + $0x8] sm:$0xff]
        %v1126 = vld [vmem:[%s1123 + $0x10] sm:$0xff]
        %v1127 = vld [vmem:[%s1123 + $0x18] sm:$0xff]
        %v1128 = vld [vmem:[%s1123 + $0x20] sm:$0xff]
        %v1129 = vld [vmem:[%s1123 + $0x28] sm:$0xff]
        %v1130 = vld [vmem:[%s1123 + $0x30] sm:$0xff]
        %v1131 = vld [vmem:[%s1123 + $0x38] sm:$0xff]
        %v1132 = vld [vmem:[%s1123 + $0x40] sm:$0xff]
        %v1133 = vld [vmem:[%s1123 + $0x48] sm:$0xff]
        %v1134 = vld [vmem:[%s1123 + $0x50] sm:$0xff]
        %v1135 = vld [vmem:[%s1123 + $0x58] sm:$0xff]
        %v1136 = vld [vmem:[%s1123 + $0x60] sm:$0xff]
        %v1137 = vld [vmem:[%s1123 + $0x68] sm:$0xff]
        %v1138 = vld [vmem:[%s1123 + $0x70] sm:$0xff]
        %v1154 = vunpack.c.l.b16 %v1124
        %v1155 = vunpack.c.h.b16 %v1124
        %v1156 = vunpack.c.l.b16 %v1125
        %v1157 = vunpack.c.h.b16 %v1125
        %v1158 = vunpack.c.l.b16 %v1126
        %v1159 = vunpack.c.h.b16 %v1126
        %v1160 = vunpack.c.l.b16 %v1127
        %v1161 = vunpack.c.h.b16 %v1127
        %v1162 = vunpack.c.l.b16 %v1128
        %v1163 = vunpack.c.h.b16 %v1128
        %v1164 = vunpack.c.l.b16 %v1129
        %v1165 = vunpack.c.h.b16 %v1129
        %v1166 = vunpack.c.l.b16 %v1130
        %v1167 = vunpack.c.h.b16 %v1130
        %v1168 = vunpack.c.l.b16 %v1131
        %v1169 = vunpack.c.h.b16 %v1131
        %v1170 = vunpack.c.l.b16 %v1132
        %v1171 = vunpack.c.h.b16 %v1132
        %v1172 = vunpack.c.l.b16 %v1133
        %v1173 = vunpack.c.h.b16 %v1133
        %v1174 = vunpack.c.l.b16 %v1134
        %v1175 = vunpack.c.h.b16 %v1134
        %v1176 = vunpack.c.l.b16 %v1135
        %v1177 = vunpack.c.h.b16 %v1135
        %v1178 = vunpack.c.l.b16 %v1136
        %v1179 = vunpack.c.h.b16 %v1136
        %v1180 = vunpack.c.l.b16 %v1137
        %v1181 = vunpack.c.h.b16 %v1137
        %v1182 = vunpack.c.l.b16 %v1138
        %v1183 = vunpack.c.h.b16 %v1138
        %v1184 = vpack.c.b16 %v1156, %v1154
        %v1185 = vpack.c.b16 %v1157, %v1155
        %v1186 = vpack.c.b16 %v1160, %v1158
        %v1187 = vpack.c.b16 %v1161, %v1159
        %v1188 = vpack.c.b16 %v1164, %v1162
        %v1189 = vpack.c.b16 %v1165, %v1163
        %v1190 = vpack.c.b16 %v1168, %v1166
        %v1191 = vpack.c.b16 %v1169, %v1167
        %v1192 = vpack.c.b16 %v1172, %v1170
        %v1193 = vpack.c.b16 %v1173, %v1171
        %v1194 = vpack.c.b16 %v1176, %v1174
        %v1195 = vpack.c.b16 %v1177, %v1175
        %v1196 = vpack.c.b16 %v1180, %v1178
        %v1197 = vpack.c.b16 %v1181, %v1179
        %v1198 = vpack.c.b16 %v1182, %v1182
        %v1199 = vpack.c.b16 %v1183, %v1183
        %vm1214 = vcmask 982016
        %v1216 = vsel %vm1214, %v1107, 0
        %vm1218 = vcmask 1043456
        %v1220 = vsel %vm1218, %v1198, 0
        %v1223 = vsel %vm1218, %v1199, 0
        %1225 = vmatpush.bf16.msra.mxu0 %v1220
        %1226 = vmatpush.bf16.msra.mxu0 %v1196
        %1227 = vmatpush.bf16.msra.mxu0 %v1194
        %1228 = vmatpush.bf16.msra.mxu0 %v1192
        %1229 = vmatpush.bf16.msra.mxu0 %v1190
        %1230 = vmatpush.bf16.msra.mxu0 %v1188
        %1231 = vmatpush.bf16.msra.mxu0 %v1186
        %1232 = vmatpush.bf16.msra.mxu0 %v1184
        %1233 = vmatmul.bf16.gmra.mxu0 %v1216
        %v1234 = vpop.f32.mrf.mxu0
        %v1235 = vadd.f32 0.0, %v1234
        %v1236 = vpop.f32.mrf.mxu0
        %1237 = vdwg.mxu0
        %1238 = vmatpush.bf16.msra.mxu0 %v1223
        %1239 = vmatpush.bf16.msra.mxu0 %v1197
        %1240 = vmatpush.bf16.msra.mxu0 %v1195
        %1241 = vmatpush.bf16.msra.mxu0 %v1193
        %1242 = vmatpush.bf16.msra.mxu0 %v1191
        %1243 = vmatpush.bf16.msra.mxu0 %v1189
        %1244 = vmatpush.bf16.msra.mxu0 %v1187
        %1245 = vmatpush.bf16.msra.mxu0 %v1185
        %1246 = vmatmul.bf16.gmra.mxu0 %v1216
        %v1247 = vpop.f32.mrf.mxu0
        %v1248 = vadd.f32 0.0, %v1247
        %v1249 = vpop.f32.mrf.mxu0
        %1250 = vdwg.mxu0
        %v1266 = vunpack.c.l.b16 %v1108
        %v1267 = vunpack.c.h.b16 %v1108
        %v1268 = vunpack.c.l.b16 %v1109
        %v1269 = vunpack.c.h.b16 %v1109
        %v1270 = vunpack.c.l.b16 %v1110
        %v1271 = vunpack.c.h.b16 %v1110
        %v1272 = vunpack.c.l.b16 %v1111
        %v1273 = vunpack.c.h.b16 %v1111
        %v1274 = vunpack.c.l.b16 %v1112
        %v1275 = vunpack.c.h.b16 %v1112
        %v1276 = vunpack.c.l.b16 %v1113
        %v1277 = vunpack.c.h.b16 %v1113
        %v1278 = vunpack.c.l.b16 %v1114
        %v1279 = vunpack.c.h.b16 %v1114
        %v1280 = vunpack.c.l.b16 %v1115
        %v1281 = vunpack.c.h.b16 %v1115
        %v1282 = vunpack.c.l.b16 %v1116
        %v1283 = vunpack.c.h.b16 %v1116
        %v1284 = vunpack.c.l.b16 %v1117
        %v1285 = vunpack.c.h.b16 %v1117
        %v1286 = vunpack.c.l.b16 %v1118
        %v1287 = vunpack.c.h.b16 %v1118
        %v1288 = vunpack.c.l.b16 %v1119
        %v1289 = vunpack.c.h.b16 %v1119
        %v1290 = vunpack.c.l.b16 %v1120
        %v1291 = vunpack.c.h.b16 %v1120
        %v1292 = vunpack.c.l.b16 %v1121
        %v1293 = vunpack.c.h.b16 %v1121
        %v1294 = vunpack.c.l.b16 %v1122
        %v1295 = vunpack.c.h.b16 %v1122
        %v1296 = vpack.c.b16 %v1268, %v1266
        %v1297 = vpack.c.b16 %v1269, %v1267
        %v1298 = vpack.c.b16 %v1272, %v1270
        %v1299 = vpack.c.b16 %v1273, %v1271
        %v1300 = vpack.c.b16 %v1276, %v1274
        %v1301 = vpack.c.b16 %v1277, %v1275
        %v1302 = vpack.c.b16 %v1280, %v1278
        %v1303 = vpack.c.b16 %v1281, %v1279
        %v1304 = vpack.c.b16 %v1284, %v1282
        %v1305 = vpack.c.b16 %v1285, %v1283
        %v1306 = vpack.c.b16 %v1288, %v1286
        %v1307 = vpack.c.b16 %v1289, %v1287
        %v1308 = vpack.c.b16 %v1292, %v1290
        %v1309 = vpack.c.b16 %v1293, %v1291
        %v1310 = vpack.c.b16 %v1294, %v1294
        %v1311 = vpack.c.b16 %v1295, %v1295
        %v1327 = vsel %vm1214, %v793, 0
        %v1330 = vsel %vm1218, %v1310, 0
        %v1333 = vsel %vm1218, %v1311, 0
        %1335 = vmatpush.bf16.msra.mxu0 %v1330
        %1336 = vmatpush.bf16.msra.mxu0 %v1308
        %1337 = vmatpush.bf16.msra.mxu0 %v1306
        %1338 = vmatpush.bf16.msra.mxu0 %v1304
        %1339 = vmatpush.bf16.msra.mxu0 %v1302
        %1340 = vmatpush.bf16.msra.mxu0 %v1300
        %1341 = vmatpush.bf16.msra.mxu0 %v1298
        %1342 = vmatpush.bf16.msra.mxu0 %v1296
        %1343 = vmatmul.bf16.gmra.mxu0 %v1327
        %v1344 = vpop.f32.mrf.mxu0
        %v1345 = vadd.f32 %v1235, %v1344
        %v1346 = vpop.f32.mrf.mxu0
        %1347 = vdwg.mxu0
        %1348 = vmatpush.bf16.msra.mxu0 %v1333
        %1349 = vmatpush.bf16.msra.mxu0 %v1309
        %1350 = vmatpush.bf16.msra.mxu0 %v1307
        %1351 = vmatpush.bf16.msra.mxu0 %v1305
        %1352 = vmatpush.bf16.msra.mxu0 %v1303
        %1353 = vmatpush.bf16.msra.mxu0 %v1301
        %1354 = vmatpush.bf16.msra.mxu0 %v1299
        %1355 = vmatpush.bf16.msra.mxu0 %v1297
        %1356 = vmatmul.bf16.gmra.mxu0 %v1327
        %v1357 = vpop.f32.mrf.mxu0
        %v1358 = vadd.f32 %v1248, %v1357
        %v1359 = vpop.f32.mrf.mxu0
        %1360 = vdwg.mxu0
        %s1361 = scalar_lea.vmem %s3, 240
        %v1362 = vld [vmem:[%s1361] sm:$0xff]
        %v1363 = vld [vmem:[%s1361 + $0x8] sm:$0xff]
        %v1364 = vld [vmem:[%s1361 + $0x10] sm:$0xff]
        %v1365 = vld [vmem:[%s1361 + $0x18] sm:$0xff]
        %v1366 = vld [vmem:[%s1361 + $0x20] sm:$0xff]
        %v1367 = vld [vmem:[%s1361 + $0x28] sm:$0xff]
        %v1368 = vld [vmem:[%s1361 + $0x30] sm:$0xff]
        %v1369 = vld [vmem:[%s1361 + $0x38] sm:$0xff]
        %v1370 = vld [vmem:[%s1361 + $0x40] sm:$0xff]
        %v1371 = vld [vmem:[%s1361 + $0x48] sm:$0xff]
        %v1372 = vld [vmem:[%s1361 + $0x50] sm:$0xff]
        %v1373 = vld [vmem:[%s1361 + $0x58] sm:$0xff]
        %v1374 = vld [vmem:[%s1361 + $0x60] sm:$0xff]
        %v1375 = vld [vmem:[%s1361 + $0x68] sm:$0xff]
        %v1376 = vld [vmem:[%s1361 + $0x70] sm:$0xff]
        %v1378 = vunpack.c.l.b16 %v793
        %v1379 = vpack.c.b16 %v1378, %v1378
        %v1381 = vshrl.u32 %v1379, 16
        %v1383 = vshll.u32 %v1379, 16
        %v1385 = vrot.slane %v1383, 1
        %v1386 = vor.u32 %v1381, %v1385
        %v1402 = vunpack.c.l.b16 %v1362
        %v1403 = vunpack.c.h.b16 %v1362
        %v1404 = vunpack.c.l.b16 %v1363
        %v1405 = vunpack.c.h.b16 %v1363
        %v1406 = vunpack.c.l.b16 %v1364
        %v1407 = vunpack.c.h.b16 %v1364
        %v1408 = vunpack.c.l.b16 %v1365
        %v1409 = vunpack.c.h.b16 %v1365
        %v1410 = vunpack.c.l.b16 %v1366
        %v1411 = vunpack.c.h.b16 %v1366
        %v1412 = vunpack.c.l.b16 %v1367
        %v1413 = vunpack.c.h.b16 %v1367
        %v1414 = vunpack.c.l.b16 %v1368
        %v1415 = vunpack.c.h.b16 %v1368
        %v1416 = vunpack.c.l.b16 %v1369
        %v1417 = vunpack.c.h.b16 %v1369
        %v1418 = vunpack.c.l.b16 %v1370
        %v1419 = vunpack.c.h.b16 %v1370
        %v1420 = vunpack.c.l.b16 %v1371
        %v1421 = vunpack.c.h.b16 %v1371
        %v1422 = vunpack.c.l.b16 %v1372
        %v1423 = vunpack.c.h.b16 %v1372
        %v1424 = vunpack.c.l.b16 %v1373
        %v1425 = vunpack.c.h.b16 %v1373
        %v1426 = vunpack.c.l.b16 %v1374
        %v1427 = vunpack.c.h.b16 %v1374
        %v1428 = vunpack.c.l.b16 %v1375
        %v1429 = vunpack.c.h.b16 %v1375
        %v1430 = vunpack.c.l.b16 %v1376
        %v1431 = vunpack.c.h.b16 %v1376
        %v1432 = vpack.c.b16 %v1404, %v1402
        %v1433 = vpack.c.b16 %v1405, %v1403
        %v1434 = vpack.c.b16 %v1408, %v1406
        %v1435 = vpack.c.b16 %v1409, %v1407
        %v1436 = vpack.c.b16 %v1412, %v1410
        %v1437 = vpack.c.b16 %v1413, %v1411
        %v1438 = vpack.c.b16 %v1416, %v1414
        %v1439 = vpack.c.b16 %v1417, %v1415
        %v1440 = vpack.c.b16 %v1420, %v1418
        %v1441 = vpack.c.b16 %v1421, %v1419
        %v1442 = vpack.c.b16 %v1424, %v1422
        %v1443 = vpack.c.b16 %v1425, %v1423
        %v1444 = vpack.c.b16 %v1428, %v1426
        %v1445 = vpack.c.b16 %v1429, %v1427
        %v1446 = vpack.c.b16 %v1430, %v1430
        %v1447 = vpack.c.b16 %v1431, %v1431
        %v1463 = vsel %vm1214, %v1386, 0
        %v1466 = vsel %vm1218, %v1446, 0
        %v1469 = vsel %vm1218, %v1447, 0
        %1471 = vmatpush.bf16.msra.mxu0 %v1466
        %1472 = vmatpush.bf16.msra.mxu0 %v1444
        %1473 = vmatpush.bf16.msra.mxu0 %v1442
        %1474 = vmatpush.bf16.msra.mxu0 %v1440
        %1475 = vmatpush.bf16.msra.mxu0 %v1438
        %1476 = vmatpush.bf16.msra.mxu0 %v1436
        %1477 = vmatpush.bf16.msra.mxu0 %v1434
        %1478 = vmatpush.bf16.msra.mxu0 %v1432
        %1479 = vmatmul.bf16.gmra.mxu0 %v1463
        %v1480 = vpop.f32.mrf.mxu0
        %v1481 = vadd.f32 0.0, %v1480
        %v1482 = vpop.f32.mrf.mxu0
        %1483 = vdwg.mxu0
        %1484 = vmatpush.bf16.msra.mxu0 %v1469
        %1485 = vmatpush.bf16.msra.mxu0 %v1445
        %1486 = vmatpush.bf16.msra.mxu0 %v1443
        %1487 = vmatpush.bf16.msra.mxu0 %v1441
        %1488 = vmatpush.bf16.msra.mxu0 %v1439
        %1489 = vmatpush.bf16.msra.mxu0 %v1437
        %1490 = vmatpush.bf16.msra.mxu0 %v1435
        %1491 = vmatpush.bf16.msra.mxu0 %v1433
        %1492 = vmatmul.bf16.gmra.mxu0 %v1463
        %v1493 = vpop.f32.mrf.mxu0
        %v1494 = vadd.f32 0.0, %v1493
        %v1495 = vpop.f32.mrf.mxu0
        %1496 = vdwg.mxu0
        %v1497 = vadd.f32 %v1345, %v1481
        %v1498 = vadd.f32 %v1358, %v1494
        %s1499 = scalar_lea.vmem %s3, 360
        %v1500 = vld [vmem:[%s1499] sm:$0xff]
        %v1501 = vld [vmem:[%s1499 + $0x8] sm:$0xff]
        %v1502 = vld [vmem:[%s1499 + $0x10] sm:$0xff]
        %v1503 = vld [vmem:[%s1499 + $0x18] sm:$0xff]
        %v1504 = vld [vmem:[%s1499 + $0x20] sm:$0xff]
        %v1505 = vld [vmem:[%s1499 + $0x28] sm:$0xff]
        %v1506 = vld [vmem:[%s1499 + $0x30] sm:$0xff]
        %v1507 = vld [vmem:[%s1499 + $0x38] sm:$0xff]
        %v1508 = vld [vmem:[%s1499 + $0x40] sm:$0xff]
        %v1509 = vld [vmem:[%s1499 + $0x48] sm:$0xff]
        %v1510 = vld [vmem:[%s1499 + $0x50] sm:$0xff]
        %v1511 = vld [vmem:[%s1499 + $0x58] sm:$0xff]
        %v1512 = vld [vmem:[%s1499 + $0x60] sm:$0xff]
        %v1513 = vld [vmem:[%s1499 + $0x68] sm:$0xff]
        %v1514 = vld [vmem:[%s1499 + $0x70] sm:$0xff]
        %v1516 = vunpack.c.l.b16 %v1107
        %v1517 = vpack.c.b16 %v1516, %v1516
        %v1519 = vshrl.u32 %v1517, 16
        %v1521 = vshll.u32 %v1517, 16
        %v1523 = vrot.slane %v1521, 1
        %v1524 = vor.u32 %v1519, %v1523
        %v1540 = vunpack.c.l.b16 %v1500
        %v1541 = vunpack.c.h.b16 %v1500
        %v1542 = vunpack.c.l.b16 %v1501
        %v1543 = vunpack.c.h.b16 %v1501
        %v1544 = vunpack.c.l.b16 %v1502
        %v1545 = vunpack.c.h.b16 %v1502
        %v1546 = vunpack.c.l.b16 %v1503
        %v1547 = vunpack.c.h.b16 %v1503
        %v1548 = vunpack.c.l.b16 %v1504
        %v1549 = vunpack.c.h.b16 %v1504
        %v1550 = vunpack.c.l.b16 %v1505
        %v1551 = vunpack.c.h.b16 %v1505
        %v1552 = vunpack.c.l.b16 %v1506
        %v1553 = vunpack.c.h.b16 %v1506
        %v1554 = vunpack.c.l.b16 %v1507
        %v1555 = vunpack.c.h.b16 %v1507
        %v1556 = vunpack.c.l.b16 %v1508
        %v1557 = vunpack.c.h.b16 %v1508
        %v1558 = vunpack.c.l.b16 %v1509
        %v1559 = vunpack.c.h.b16 %v1509
        %v1560 = vunpack.c.l.b16 %v1510
        %v1561 = vunpack.c.h.b16 %v1510
        %v1562 = vunpack.c.l.b16 %v1511
        %v1563 = vunpack.c.h.b16 %v1511
        %v1564 = vunpack.c.l.b16 %v1512
        %v1565 = vunpack.c.h.b16 %v1512
        %v1566 = vunpack.c.l.b16 %v1513
        %v1567 = vunpack.c.h.b16 %v1513
        %v1568 = vunpack.c.l.b16 %v1514
        %v1569 = vunpack.c.h.b16 %v1514
        %v1570 = vpack.c.b16 %v1542, %v1540
        %v1571 = vpack.c.b16 %v1543, %v1541
        %v1572 = vpack.c.b16 %v1546, %v1544
        %v1573 = vpack.c.b16 %v1547, %v1545
        %v1574 = vpack.c.b16 %v1550, %v1548
        %v1575 = vpack.c.b16 %v1551, %v1549
        %v1576 = vpack.c.b16 %v1554, %v1552
        %v1577 = vpack.c.b16 %v1555, %v1553
        %v1578 = vpack.c.b16 %v1558, %v1556
        %v1579 = vpack.c.b16 %v1559, %v1557
        %v1580 = vpack.c.b16 %v1562, %v1560
        %v1581 = vpack.c.b16 %v1563, %v1561
        %v1582 = vpack.c.b16 %v1566, %v1564
        %v1583 = vpack.c.b16 %v1567, %v1565
        %v1584 = vpack.c.b16 %v1568, %v1568
        %v1585 = vpack.c.b16 %v1569, %v1569
        %v1601 = vsel %vm1214, %v1524, 0
        %v1604 = vsel %vm1218, %v1584, 0
        %v1607 = vsel %vm1218, %v1585, 0
        %1609 = vmatpush.bf16.msra.mxu0 %v1604
        %1610 = vmatpush.bf16.msra.mxu0 %v1582
        %1611 = vmatpush.bf16.msra.mxu0 %v1580
        %1612 = vmatpush.bf16.msra.mxu0 %v1578
        %1613 = vmatpush.bf16.msra.mxu0 %v1576
        %1614 = vmatpush.bf16.msra.mxu0 %v1574
        %1615 = vmatpush.bf16.msra.mxu0 %v1572
        %1616 = vmatpush.bf16.msra.mxu0 %v1570
        %1617 = vmatmul.bf16.gmra.mxu0 %v1601
        %v1618 = vpop.f32.mrf.mxu0
        %v1619 = vadd.f32 0.0, %v1618
        %v1620 = vpop.f32.mrf.mxu0
        %1621 = vdwg.mxu0
        %1622 = vmatpush.bf16.msra.mxu0 %v1607
        %1623 = vmatpush.bf16.msra.mxu0 %v1583
        %1624 = vmatpush.bf16.msra.mxu0 %v1581
        %1625 = vmatpush.bf16.msra.mxu0 %v1579
        %1626 = vmatpush.bf16.msra.mxu0 %v1577
        %1627 = vmatpush.bf16.msra.mxu0 %v1575
        %1628 = vmatpush.bf16.msra.mxu0 %v1573
        %1629 = vmatpush.bf16.msra.mxu0 %v1571
        %1630 = vmatmul.bf16.gmra.mxu0 %v1601
        %v1631 = vpop.f32.mrf.mxu0
        %v1632 = vadd.f32 0.0, %v1631
        %v1633 = vpop.f32.mrf.mxu0
        %1634 = vdwg.mxu0
        %v1635 = vadd.f32 %v1497, %v1619
        %v1636 = vadd.f32 %v1498, %v1632
        %s1637 = scalar_lea.vmem %s3, 480
        %v1638 = vld [vmem:[%s1637] sm:$0xff]
        %v1639 = vld [vmem:[%s1637 + $0x8] sm:$0xff]
        %v1640 = vld [vmem:[%s1637 + $0x10] sm:$0xff]
        %v1641 = vld [vmem:[%s1637 + $0x18] sm:$0xff]
        %v1642 = vld [vmem:[%s1637 + $0x20] sm:$0xff]
        %v1643 = vld [vmem:[%s1637 + $0x28] sm:$0xff]
        %v1644 = vld [vmem:[%s1637 + $0x30] sm:$0xff]
        %v1645 = vld [vmem:[%s1637 + $0x38] sm:$0xff]
        %v1646 = vld [vmem:[%s1637 + $0x40] sm:$0xff]
        %v1647 = vld [vmem:[%s1637 + $0x48] sm:$0xff]
        %v1648 = vld [vmem:[%s1637 + $0x50] sm:$0xff]
        %v1649 = vld [vmem:[%s1637 + $0x58] sm:$0xff]
        %v1650 = vld [vmem:[%s1637 + $0x60] sm:$0xff]
        %v1651 = vld [vmem:[%s1637 + $0x68] sm:$0xff]
        %v1652 = vld [vmem:[%s1637 + $0x70] sm:$0xff]
        %v1653 = vrot.slane %v1379, 1
        %v1669 = vunpack.c.l.b16 %v1638
        %v1670 = vunpack.c.h.b16 %v1638
        %v1671 = vunpack.c.l.b16 %v1639
        %v1672 = vunpack.c.h.b16 %v1639
        %v1673 = vunpack.c.l.b16 %v1640
        %v1674 = vunpack.c.h.b16 %v1640
        %v1675 = vunpack.c.l.b16 %v1641
        %v1676 = vunpack.c.h.b16 %v1641
        %v1677 = vunpack.c.l.b16 %v1642
        %v1678 = vunpack.c.h.b16 %v1642
        %v1679 = vunpack.c.l.b16 %v1643
        %v1680 = vunpack.c.h.b16 %v1643
        %v1681 = vunpack.c.l.b16 %v1644
        %v1682 = vunpack.c.h.b16 %v1644
        %v1683 = vunpack.c.l.b16 %v1645
        %v1684 = vunpack.c.h.b16 %v1645
        %v1685 = vunpack.c.l.b16 %v1646
        %v1686 = vunpack.c.h.b16 %v1646
        %v1687 = vunpack.c.l.b16 %v1647
        %v1688 = vunpack.c.h.b16 %v1647
        %v1689 = vunpack.c.l.b16 %v1648
        %v1690 = vunpack.c.h.b16 %v1648
        %v1691 = vunpack.c.l.b16 %v1649
        %v1692 = vunpack.c.h.b16 %v1649
        %v1693 = vunpack.c.l.b16 %v1650
        %v1694 = vunpack.c.h.b16 %v1650
        %v1695 = vunpack.c.l.b16 %v1651
        %v1696 = vunpack.c.h.b16 %v1651
        %v1697 = vunpack.c.l.b16 %v1652
        %v1698 = vunpack.c.h.b16 %v1652
        %v1699 = vpack.c.b16 %v1671, %v1669
        %v1700 = vpack.c.b16 %v1672, %v1670
        %v1701 = vpack.c.b16 %v1675, %v1673
        %v1702 = vpack.c.b16 %v1676, %v1674
        %v1703 = vpack.c.b16 %v1679, %v1677
        %v1704 = vpack.c.b16 %v1680, %v1678
        %v1705 = vpack.c.b16 %v1683, %v1681
        %v1706 = vpack.c.b16 %v1684, %v1682
        %v1707 = vpack.c.b16 %v1687, %v1685
        %v1708 = vpack.c.b16 %v1688, %v1686
        %v1709 = vpack.c.b16 %v1691, %v1689
        %v1710 = vpack.c.b16 %v1692, %v1690
        %v1711 = vpack.c.b16 %v1695, %v1693
        %v1712 = vpack.c.b16 %v1696, %v1694
        %v1713 = vpack.c.b16 %v1697, %v1697
        %v1714 = vpack.c.b16 %v1698, %v1698
        %v1730 = vsel %vm1214, %v1653, 0
        %v1733 = vsel %vm1218, %v1713, 0
        %v1736 = vsel %vm1218, %v1714, 0
        %1738 = vmatpush.bf16.msra.mxu0 %v1733
        %1739 = vmatpush.bf16.msra.mxu0 %v1711
        %1740 = vmatpush.bf16.msra.mxu0 %v1709
        %1741 = vmatpush.bf16.msra.mxu0 %v1707
        %1742 = vmatpush.bf16.msra.mxu0 %v1705
        %1743 = vmatpush.bf16.msra.mxu0 %v1703
        %1744 = vmatpush.bf16.msra.mxu0 %v1701
        %1745 = vmatpush.bf16.msra.mxu0 %v1699
        %1746 = vmatmul.bf16.gmra.mxu0 %v1730
        %v1747 = vpop.f32.mrf.mxu0
        %v1748 = vadd.f32 0.0, %v1747
        %v1749 = vpop.f32.mrf.mxu0
        %1750 = vdwg.mxu0
        %1751 = vmatpush.bf16.msra.mxu0 %v1736
        %1752 = vmatpush.bf16.msra.mxu0 %v1712
        %1753 = vmatpush.bf16.msra.mxu0 %v1710
        %1754 = vmatpush.bf16.msra.mxu0 %v1708
        %1755 = vmatpush.bf16.msra.mxu0 %v1706
        %1756 = vmatpush.bf16.msra.mxu0 %v1704
        %1757 = vmatpush.bf16.msra.mxu0 %v1702
        %1758 = vmatpush.bf16.msra.mxu0 %v1700
        %1759 = vmatmul.bf16.gmra.mxu0 %v1730
        %v1760 = vpop.f32.mrf.mxu0
        %v1761 = vadd.f32 0.0, %v1760
        %v1762 = vpop.f32.mrf.mxu0
        %1763 = vdwg.mxu0
        %v1764 = vadd.f32 %v1635, %v1748
        %v1765 = vadd.f32 %v1636, %v1761
        %1766 = vmatpush.bf16.msra.mxu0 %v1220
        %1767 = vmatpush.bf16.msra.mxu0 %v1196
        %1768 = vmatpush.bf16.msra.mxu0 %v1194
        %1769 = vmatpush.bf16.msra.mxu0 %v1192
        %1770 = vmatpush.bf16.msra.mxu0 %v1190
        %1771 = vmatpush.bf16.msra.mxu0 %v1188
        %1772 = vmatpush.bf16.msra.mxu0 %v1186
        %1773 = vmatpush.bf16.msra.mxu0 %v1184
        %1774 = vmatmul.bf16.gmra.mxu0 %v1463
        %v1775 = vpop.f32.mrf.mxu0
        %v1776 = vadd.f32 0.0, %v1775
        %v1777 = vpop.f32.mrf.mxu0
        %1778 = vdwg.mxu0
        %1779 = vmatpush.bf16.msra.mxu0 %v1223
        %1780 = vmatpush.bf16.msra.mxu0 %v1197
        %1781 = vmatpush.bf16.msra.mxu0 %v1195
        %1782 = vmatpush.bf16.msra.mxu0 %v1193
        %1783 = vmatpush.bf16.msra.mxu0 %v1191
        %1784 = vmatpush.bf16.msra.mxu0 %v1189
        %1785 = vmatpush.bf16.msra.mxu0 %v1187
        %1786 = vmatpush.bf16.msra.mxu0 %v1185
        %1787 = vmatmul.bf16.gmra.mxu0 %v1463
        %v1788 = vpop.f32.mrf.mxu0
        %v1789 = vadd.f32 0.0, %v1788
        %v1790 = vpop.f32.mrf.mxu0
        %1791 = vdwg.mxu0
        %1792 = vmatpush.bf16.msra.mxu0 %v1330
        %1793 = vmatpush.bf16.msra.mxu0 %v1308
        %1794 = vmatpush.bf16.msra.mxu0 %v1306
        %1795 = vmatpush.bf16.msra.mxu0 %v1304
        %1796 = vmatpush.bf16.msra.mxu0 %v1302
        %1797 = vmatpush.bf16.msra.mxu0 %v1300
        %1798 = vmatpush.bf16.msra.mxu0 %v1298
        %1799 = vmatpush.bf16.msra.mxu0 %v1296
        %1800 = vmatmul.bf16.gmra.mxu0 %v1216
        %v1801 = vpop.f32.mrf.mxu0
        %v1802 = vadd.f32 %v1776, %v1801
        %v1803 = vpop.f32.mrf.mxu0
        %1804 = vdwg.mxu0
        %1805 = vmatpush.bf16.msra.mxu0 %v1333
        %1806 = vmatpush.bf16.msra.mxu0 %v1309
        %1807 = vmatpush.bf16.msra.mxu0 %v1307
        %1808 = vmatpush.bf16.msra.mxu0 %v1305
        %1809 = vmatpush.bf16.msra.mxu0 %v1303
        %1810 = vmatpush.bf16.msra.mxu0 %v1301
        %1811 = vmatpush.bf16.msra.mxu0 %v1299
        %1812 = vmatpush.bf16.msra.mxu0 %v1297
        %1813 = vmatmul.bf16.gmra.mxu0 %v1216
        %v1814 = vpop.f32.mrf.mxu0
        %v1815 = vadd.f32 %v1789, %v1814
        %v1816 = vpop.f32.mrf.mxu0
        %1817 = vdwg.mxu0
        %1818 = vmatpush.bf16.msra.mxu0 %v1466
        %1819 = vmatpush.bf16.msra.mxu0 %v1444
        %1820 = vmatpush.bf16.msra.mxu0 %v1442
        %1821 = vmatpush.bf16.msra.mxu0 %v1440
        %1822 = vmatpush.bf16.msra.mxu0 %v1438
        %1823 = vmatpush.bf16.msra.mxu0 %v1436
        %1824 = vmatpush.bf16.msra.mxu0 %v1434
        %1825 = vmatpush.bf16.msra.mxu0 %v1432
        %1826 = vmatmul.bf16.gmra.mxu0 %v1601
        %v1827 = vpop.f32.mrf.mxu0
        %v1828 = vadd.f32 0.0, %v1827
        %v1829 = vpop.f32.mrf.mxu0
        %1830 = vdwg.mxu0
        %1831 = vmatpush.bf16.msra.mxu0 %v1469
        %1832 = vmatpush.bf16.msra.mxu0 %v1445
        %1833 = vmatpush.bf16.msra.mxu0 %v1443
        %1834 = vmatpush.bf16.msra.mxu0 %v1441
        %1835 = vmatpush.bf16.msra.mxu0 %v1439
        %1836 = vmatpush.bf16.msra.mxu0 %v1437
        %1837 = vmatpush.bf16.msra.mxu0 %v1435
        %1838 = vmatpush.bf16.msra.mxu0 %v1433
        %1839 = vmatmul.bf16.gmra.mxu0 %v1601
        %v1840 = vpop.f32.mrf.mxu0
        %v1841 = vadd.f32 0.0, %v1840
        %v1842 = vpop.f32.mrf.mxu0
        %1843 = vdwg.mxu0
        %v1844 = vadd.f32 %v1802, %v1828
        %v1845 = vadd.f32 %v1815, %v1841
        %1846 = vmatpush.bf16.msra.mxu0 %v1604
        %1847 = vmatpush.bf16.msra.mxu0 %v1582
        %1848 = vmatpush.bf16.msra.mxu0 %v1580
        %1849 = vmatpush.bf16.msra.mxu0 %v1578
        %1850 = vmatpush.bf16.msra.mxu0 %v1576
        %1851 = vmatpush.bf16.msra.mxu0 %v1574
        %1852 = vmatpush.bf16.msra.mxu0 %v1572
        %1853 = vmatpush.bf16.msra.mxu0 %v1570
        %1854 = vmatmul.bf16.gmra.mxu0 %v1730
        %v1855 = vpop.f32.mrf.mxu0
        %v1856 = vadd.f32 0.0, %v1855
        %v1857 = vpop.f32.mrf.mxu0
        %1858 = vdwg.mxu0
        %1859 = vmatpush.bf16.msra.mxu0 %v1607
        %1860 = vmatpush.bf16.msra.mxu0 %v1583
        %1861 = vmatpush.bf16.msra.mxu0 %v1581
        %1862 = vmatpush.bf16.msra.mxu0 %v1579
        %1863 = vmatpush.bf16.msra.mxu0 %v1577
        %1864 = vmatpush.bf16.msra.mxu0 %v1575
        %1865 = vmatpush.bf16.msra.mxu0 %v1573
        %1866 = vmatpush.bf16.msra.mxu0 %v1571
        %1867 = vmatmul.bf16.gmra.mxu0 %v1730
        %v1868 = vpop.f32.mrf.mxu0
        %v1869 = vadd.f32 0.0, %v1868
        %v1870 = vpop.f32.mrf.mxu0
        %1871 = vdwg.mxu0
        %v1872 = vadd.f32 %v1844, %v1856
        %v1873 = vadd.f32 %v1845, %v1869
        %v1874 = vrot.slane %v1517, 1
        %v1876 = vsel %vm1214, %v1874, 0
        %1878 = vmatpush.bf16.msra.mxu0 %v1733
        %1879 = vmatpush.bf16.msra.mxu0 %v1711
        %1880 = vmatpush.bf16.msra.mxu0 %v1709
        %1881 = vmatpush.bf16.msra.mxu0 %v1707
        %1882 = vmatpush.bf16.msra.mxu0 %v1705
        %1883 = vmatpush.bf16.msra.mxu0 %v1703
        %1884 = vmatpush.bf16.msra.mxu0 %v1701
        %1885 = vmatpush.bf16.msra.mxu0 %v1699
        %1886 = vmatmul.bf16.gmra.mxu0 %v1876
        %v1887 = vpop.f32.mrf.mxu0
        %v1888 = vadd.f32 0.0, %v1887
        %v1889 = vpop.f32.mrf.mxu0
        %1890 = vdwg.mxu0
        %1891 = vmatpush.bf16.msra.mxu0 %v1736
        %1892 = vmatpush.bf16.msra.mxu0 %v1712
        %1893 = vmatpush.bf16.msra.mxu0 %v1710
        %1894 = vmatpush.bf16.msra.mxu0 %v1708
        %1895 = vmatpush.bf16.msra.mxu0 %v1706
        %1896 = vmatpush.bf16.msra.mxu0 %v1704
        %1897 = vmatpush.bf16.msra.mxu0 %v1702
        %1898 = vmatpush.bf16.msra.mxu0 %v1700
        %1899 = vmatmul.bf16.gmra.mxu0 %v1876
        %v1900 = vpop.f32.mrf.mxu0
        %v1901 = vadd.f32 0.0, %v1900
        %v1902 = vpop.f32.mrf.mxu0
        %1903 = vdwg.mxu0
        %v1904 = vadd.f32 %v1872, %v1888
        %v1905 = vadd.f32 %v1873, %v1901
        %v1906 = vmax.f32 %v1764, %v1904
        %v1907 = vmax.f32 %v1765, %v1905
        %1910 = vrot.lane.b32.xlu0 %v1906, 48
        %v1911 = vpop.permute.xlu0 %1910
        %1912 = vrot.lane.b32.xlu0 %v1907, 48
        %v1913 = vpop.permute.xlu0 %1912
        %vm1914 = vcmask 392192
        %v1915 = vsel %vm1914, %v1911, %v1913
        %v1917 = vmax.f32 %v1906, %v1915
        %v1918 = vld [vmem:[%s4] sm:$0x1]
        %v1920 = vperm.slane %v1918, 0
        %v1922 = vadd.f32 %v1917, %v1920
        %v1923 = vmax.f32 %v1922, 0.0
        %v1924 = vpack.c.bf16 %v1923, %v1923
        %v1925 = vld [vmem:[%s5] sm:$0xf]
        %v1926 = vld [vmem:[%s5 + $0x4] sm:$0xf]
        %v1927 = vld [vmem:[%s5 + $0x8] sm:$0xf]
        %v1928 = vld [vmem:[%s5 + $0xc] sm:$0xf]
        %v1929 = vld [vmem:[%s5 + $0x10] sm:$0xf]
        %v1930 = vld [vmem:[%s5 + $0x14] sm:$0xf]
        %v1931 = vld [vmem:[%s5 + $0x18] sm:$0xf]
        %v1932 = vld [vmem:[%s5 + $0x1c] sm:$0xf]
        %v1933 = vld [vmem:[%s5 + $0x20] sm:$0xf]
        %v1934 = vld [vmem:[%s5 + $0x24] sm:$0xf]
        %s1935 = scalar_lea.vmem %s5, 40
        %v1936 = vld [vmem:[%s1935] sm:$0xf]
        %v1937 = vld [vmem:[%s1935 + $0x4] sm:$0xf]
        %v1938 = vld [vmem:[%s1935 + $0x8] sm:$0xf]
        %v1939 = vld [vmem:[%s1935 + $0xc] sm:$0xf]
        %v1940 = vld [vmem:[%s1935 + $0x10] sm:$0xf]
        %v1941 = vld [vmem:[%s1935 + $0x14] sm:$0xf]
        %v1942 = vld [vmem:[%s1935 + $0x18] sm:$0xf]
        %v1943 = vld [vmem:[%s1935 + $0x1c] sm:$0xf]
        %v1944 = vld [vmem:[%s1935 + $0x20] sm:$0xf]
        %v1945 = vld [vmem:[%s1935 + $0x24] sm:$0xf]
        %v1947 = vunpack.c.l.b16 %v1924
        %v1948 = vpack.c.b16 %v1947, %v1947
        %v1950 = vshrl.u32 %v1948, 16
        %v1962 = vunpack.c.l.b16 %v1936
        %v1963 = vunpack.c.l.b16 %v1937
        %v1964 = vunpack.c.l.b16 %v1938
        %v1965 = vunpack.c.l.b16 %v1939
        %v1966 = vunpack.c.l.b16 %v1940
        %v1967 = vunpack.c.l.b16 %v1941
        %v1968 = vunpack.c.l.b16 %v1942
        %v1969 = vunpack.c.l.b16 %v1943
        %v1970 = vunpack.c.l.b16 %v1944
        %v1971 = vunpack.c.l.b16 %v1945
        %v1972 = vpack.c.b16 %v1963, %v1962
        %v1973 = vpack.c.b16 %v1965, %v1964
        %v1974 = vpack.c.b16 %v1967, %v1966
        %v1975 = vpack.c.b16 %v1969, %v1968
        %v1976 = vpack.c.b16 %v1971, %v1970
        %vm1982 = vcmask 654336
        %v1984 = vsel %vm1982, %v1950, 0
        %1986 = vmatpush.bf16.msra.mxu0 0
        %1987 = vmatpush.bf16.msra.mxu0 0
        %1988 = vmatpush.bf16.msra.mxu0 0
        %1989 = vmatpush.bf16.msra.mxu0 %v1976
        %1990 = vmatpush.bf16.msra.mxu0 %v1975
        %1991 = vmatpush.bf16.msra.mxu0 %v1974
        %1992 = vmatpush.bf16.msra.mxu0 %v1973
        %1993 = vmatpush.bf16.msra.mxu0 %v1972
        %1994 = vmatmul.bf16.gmra.mxu0 %v1984
        %v1995 = vpop.f32.mrf.mxu0
        %v1996 = vadd.f32 0.0, %v1995
        %v1997 = vpop.f32.mrf.mxu0
        %1998 = vdwg.mxu0
        %v2009 = vunpack.c.l.b16 %v1925
        %v2010 = vunpack.c.l.b16 %v1926
        %v2011 = vunpack.c.l.b16 %v1927
        %v2012 = vunpack.c.l.b16 %v1928
        %v2013 = vunpack.c.l.b16 %v1929
        %v2014 = vunpack.c.l.b16 %v1930
        %v2015 = vunpack.c.l.b16 %v1931
        %v2016 = vunpack.c.l.b16 %v1932
        %v2017 = vunpack.c.l.b16 %v1933
        %v2018 = vunpack.c.l.b16 %v1934
        %v2019 = vpack.c.b16 %v2010, %v2009
        %v2020 = vpack.c.b16 %v2012, %v2011
        %v2021 = vpack.c.b16 %v2014, %v2013
        %v2022 = vpack.c.b16 %v2016, %v2015
        %v2023 = vpack.c.b16 %v2018, %v2017
        %v2030 = vsel %vm1982, %v1924, 0
        %2032 = vmatpush.bf16.msra.mxu0 0
        %2033 = vmatpush.bf16.msra.mxu0 0
        %2034 = vmatpush.bf16.msra.mxu0 0
        %2035 = vmatpush.bf16.msra.mxu0 %v2023
        %2036 = vmatpush.bf16.msra.mxu0 %v2022
        %2037 = vmatpush.bf16.msra.mxu0 %v2021
        %2038 = vmatpush.bf16.msra.mxu0 %v2020
        %2039 = vmatpush.bf16.msra.mxu0 %v2019
        %2040 = vmatmul.bf16.gmra.mxu0 %v2030
        %v2041 = vpop.f32.mrf.mxu0
        %v2042 = vadd.f32 %v1996, %v2041
        %v2043 = vpop.f32.mrf.mxu0
        %2044 = vdwg.mxu0
        %s2045 = scalar_lea.vmem %s5, 80
        %v2046 = vld [vmem:[%s2045] sm:$0xf]
        %v2047 = vld [vmem:[%s2045 + $0x4] sm:$0xf]
        %v2048 = vld [vmem:[%s2045 + $0x8] sm:$0xf]
        %v2049 = vld [vmem:[%s2045 + $0xc] sm:$0xf]
        %v2050 = vld [vmem:[%s2045 + $0x10] sm:$0xf]
        %v2051 = vld [vmem:[%s2045 + $0x14] sm:$0xf]
        %v2052 = vld [vmem:[%s2045 + $0x18] sm:$0xf]
        %v2053 = vld [vmem:[%s2045 + $0x1c] sm:$0xf]
        %v2054 = vld [vmem:[%s2045 + $0x20] sm:$0xf]
        %v2055 = vld [vmem:[%s2045 + $0x24] sm:$0xf]
        %v2056 = vrot.slane %v1948, 1
        %v2067 = vunpack.c.l.b16 %v2046
        %v2068 = vunpack.c.l.b16 %v2047
        %v2069 = vunpack.c.l.b16 %v2048
        %v2070 = vunpack.c.l.b16 %v2049
        %v2071 = vunpack.c.l.b16 %v2050
        %v2072 = vunpack.c.l.b16 %v2051
        %v2073 = vunpack.c.l.b16 %v2052
        %v2074 = vunpack.c.l.b16 %v2053
        %v2075 = vunpack.c.l.b16 %v2054
        %v2076 = vunpack.c.l.b16 %v2055
        %v2077 = vpack.c.b16 %v2068, %v2067
        %v2078 = vpack.c.b16 %v2070, %v2069
        %v2079 = vpack.c.b16 %v2072, %v2071
        %v2080 = vpack.c.b16 %v2074, %v2073
        %v2081 = vpack.c.b16 %v2076, %v2075
        %v2088 = vsel %vm1982, %v2056, 0
        %2090 = vmatpush.bf16.msra.mxu0 0
        %2091 = vmatpush.bf16.msra.mxu0 0
        %2092 = vmatpush.bf16.msra.mxu0 0
        %2093 = vmatpush.bf16.msra.mxu0 %v2081
        %2094 = vmatpush.bf16.msra.mxu0 %v2080
        %2095 = vmatpush.bf16.msra.mxu0 %v2079
        %2096 = vmatpush.bf16.msra.mxu0 %v2078
        %2097 = vmatpush.bf16.msra.mxu0 %v2077
        %2098 = vmatmul.bf16.gmra.mxu0 %v2088
        %v2099 = vpop.f32.mrf.mxu0
        %v2100 = vadd.f32 0.0, %v2099
        %v2101 = vpop.f32.mrf.mxu0
        %2102 = vdwg.mxu0
        %v2103 = vadd.f32 %v2042, %v2100
        %s2104 = scalar_lea.vmem %s5, 120
        %v2105 = vld [vmem:[%s2104] sm:$0xf]
        %v2106 = vld [vmem:[%s2104 + $0x4] sm:$0xf]
        %v2107 = vld [vmem:[%s2104 + $0x8] sm:$0xf]
        %v2108 = vld [vmem:[%s2104 + $0xc] sm:$0xf]
        %v2109 = vld [vmem:[%s2104 + $0x10] sm:$0xf]
        %v2110 = vld [vmem:[%s2104 + $0x14] sm:$0xf]
        %v2111 = vld [vmem:[%s2104 + $0x18] sm:$0xf]
        %v2112 = vld [vmem:[%s2104 + $0x1c] sm:$0xf]
        %v2113 = vld [vmem:[%s2104 + $0x20] sm:$0xf]
        %v2114 = vld [vmem:[%s2104 + $0x24] sm:$0xf]
        %v2115 = vrot.slane %v1950, 1
        %v2126 = vunpack.c.l.b16 %v2105
        %v2127 = vunpack.c.l.b16 %v2106
        %v2128 = vunpack.c.l.b16 %v2107
        %v2129 = vunpack.c.l.b16 %v2108
        %v2130 = vunpack.c.l.b16 %v2109
        %v2131 = vunpack.c.l.b16 %v2110
        %v2132 = vunpack.c.l.b16 %v2111
        %v2133 = vunpack.c.l.b16 %v2112
        %v2134 = vunpack.c.l.b16 %v2113
        %v2135 = vunpack.c.l.b16 %v2114
        %v2136 = vpack.c.b16 %v2127, %v2126
        %v2137 = vpack.c.b16 %v2129, %v2128
        %v2138 = vpack.c.b16 %v2131, %v2130
        %v2139 = vpack.c.b16 %v2133, %v2132
        %v2140 = vpack.c.b16 %v2135, %v2134
        %v2147 = vsel %vm1982, %v2115, 0
        %2149 = vmatpush.bf16.msra.mxu0 0
        %2150 = vmatpush.bf16.msra.mxu0 0
        %2151 = vmatpush.bf16.msra.mxu0 0
        %2152 = vmatpush.bf16.msra.mxu0 %v2140
        %2153 = vmatpush.bf16.msra.mxu0 %v2139
        %2154 = vmatpush.bf16.msra.mxu0 %v2138
        %2155 = vmatpush.bf16.msra.mxu0 %v2137
        %2156 = vmatpush.bf16.msra.mxu0 %v2136
        %2157 = vmatmul.bf16.gmra.mxu0 %v2147
        %v2158 = vpop.f32.mrf.mxu0
        %v2159 = vadd.f32 0.0, %v2158
        %v2160 = vpop.f32.mrf.mxu0
        %2161 = vdwg.mxu0
        %v2162 = vadd.f32 %v2103, %v2159
        %v2163 = vld [vmem:[%s6] sm:$0x1]
        %v2164 = vadd.f32 %v2162, %v2163
        %v2165 = vmax.f32 %v2164, 0.0
        %v2166 = vpack.c.bf16 %v2165, %v2165
        %v2167 = vld [vmem:[%s7] sm:$0xf]
        %v2168 = vld [vmem:[%s7 + $0x4] sm:$0xf]
        %v2169 = vld [vmem:[%s7 + $0x8] sm:$0xf]
        %v2170 = vld [vmem:[%s7 + $0xc] sm:$0xf]
        %v2171 = vld [vmem:[%s7 + $0x10] sm:$0xf]
        %v2172 = vld [vmem:[%s7 + $0x14] sm:$0xf]
        %v2173 = vld [vmem:[%s7 + $0x18] sm:$0x1]
        %v2174 = vld [vmem:[%s8] sm:$0x1]
        %v2182 = vunpack.c.l.b16 %v2167
        %v2183 = vunpack.c.l.b16 %v2168
        %v2184 = vunpack.c.l.b16 %v2169
        %v2185 = vunpack.c.l.b16 %v2170
        %v2186 = vunpack.c.l.b16 %v2171
        %v2187 = vunpack.c.l.b16 %v2172
        %v2188 = vunpack.c.l.b16 %v2173
        %v2189 = vpack.c.b16 %v2183, %v2182
        %v2190 = vpack.c.b16 %v2185, %v2184
        %v2191 = vpack.c.b16 %v2187, %v2186
        %v2192 = vpack.c.b16 %v2188, %v2188
        %vm2196 = vcmask 408576
        %v2198 = vsel %vm2196, %v2166, 0
        %vm2200 = vcmask 1040384
        %v2202 = vsel %vm2200, %v2192, 0
        %2204 = vmatpush.bf16.msra.mxu0 0
        %2205 = vmatpush.bf16.msra.mxu0 0
        %2206 = vmatpush.bf16.msra.mxu0 0
        %2207 = vmatpush.bf16.msra.mxu0 0
        %2208 = vmatpush.bf16.msra.mxu0 %v2202
        %2209 = vmatpush.bf16.msra.mxu0 %v2191
        %2210 = vmatpush.bf16.msra.mxu0 %v2190
        %2211 = vmatpush.bf16.msra.mxu0 %v2189
        %2212 = vmatmul.bf16.gmra.mxu0 %v2198
        %v2213 = vpop.f32.mrf.mxu0
        %v2214 = vadd.f32 %v2174, %v2213
        %v2215 = vpop.f32.mrf.mxu0
        %2216 = vdwg.mxu0
        %vm2217 = vcmask 73728
        %v2218 = vsel %vm2217, %v2214, -inf
        %2219 = vmax.xlane.f32.xlu0 %v2218
        %v2220 = vpop.xlane.xlu0 %2219
        %v2221 = vsub.f32 %v2214, %v2220
        %v2222 = vmul.f32 %v2221, 1.442695
        %v2223 = vpow.pop %v2222
        %v2224 = vsel %vm2217, %v2223, 0.0
        %2225 = vadd.xlane.f32.xlu0 %v2224
        %v2226 = vpop.xlane.xlu0 %2225
        %v2227 = vlog2.pop %v2226
        %v2228 = vmul.f32 %v2227, 0.6931472
        %v2229 = vsub.f32 %v2221, %v2228
        %2230 = vst.msk [vmem:[%s324] sm:$0x1] %vm2217, %v2229
        %s2231 = sand.u32 %s225, 1
        %s2232 = scalar_lea.sflag [#allocation3], %s2231
        %s2233 = sand.u32 %s225, 1
        %s2234 = scalar_lea.vmem [#allocation2], %s2233
        // Predicated region
        $region57: #{net_forward.1} parent=55 // pred_check
          %p2235 = pneg %p235
        $region58: #{net_forward.1} parent=55 // pred_check_branch
          %2237 = sbr.rel (%p2235) target = $region60
        $region59: #{net_forward.1} parent=55 // pred_region
          %2239 = vsyncadd %s2232, 0
          %s2240 = scalar_lea.hbm %s9, %s23
          %s2242 = sshll.u32 %s2234, 4
          %s2243 = int_to_ptr.vmem [resolvable:$true] %s2242
          %s2244 = sshll.u32 %s2240, 4
          %s2245 = int_to_ptr.hbm [resolvable:$true] %s2244
          %2247 = dma.vmem_to_hbm [thread:$0]  %s2243, 16, %s2245, %s2232
        $region60: #{net_forward.1} parent=55 // pred_fallthru
          _
      $region56: #{net_forward.1} parent=5 // pred_fallthru
        _
      %p2248 = scmp.le.s32.totalorder 2, %s18
      // Predicated region
      $region61: #{net_forward.1} parent=5 // pred_check
        %p2249 = pneg %p2248
      $region62: #{net_forward.1} parent=5 // pred_check_branch
        %2251 = sbr.rel (%p2249) target = $region64
      $region63: #{net_forward.1} parent=5 // pred_region
        %s2252 = ssub.s32 %s18, 2
        // Predicated region
        $region65: #{net_forward.1} parent=63 // pred_check
          %p2253 = pneg %p241
        $region66: #{net_forward.1} parent=63 // pred_check_branch
          %2255 = sbr.rel (%p2253) target = $region68
        $region67: #{net_forward.1} parent=63 // pred_region
          %s2256 = sand.u32 %s226, 1
          %s2257 = scalar_lea.sflag [#allocation3], %s2256
          %s2258 = sand.u32 %s226, 1
          %s2259 = scalar_lea.vmem [#allocation2], %s2258
          %2261 = dma.done %s2257, 16
        $region68: #{net_forward.1} parent=63 // pred_fallthru
          _
      $region64: #{net_forward.1} parent=5 // pred_fallthru
        _
    $region6: #{net_forward.1} parent=1 // loop_footer
      %s22 = sadd.s32 1, %s18
    $region7: #{net_forward.1} parent=1 // loop_footer_branch
      %17 = sbr.rel target = $region3
    $region8: #{net_forward.1} parent=1 // loop_exit
      _
    %2262 = vsyncpa [#allocation3], 1
    %s2263 = scalar_lea.sflag [#allocation3], 1
    %2264 = vsyncpa %s2263, 1

</llo_original>
